<compile_context>
chip_gen: v7x
topology: tpu7x:2x2x1
jax: 0.10.0
libtpu: 0.0.40
codegen_flags: <defaults>
</compile_context>

<pallas_src>
import jax
import jax.numpy as jnp
from jax import lax
from jax.experimental import pallas as pl
from jax.experimental.pallas import tpu as pltpu


def _embed_kernel(x_ref, w_ref, pos_ref, o_ref):
    # x_ref:   (P, K)   bf16 patch matrix for one batch element
    # w_ref:   (OC, K)  bf16 flattened conv weight (OIHW reshaped, NOT transposed)
    # pos_ref: (P, OC)  f32 position embedding with conv bias folded in
    # o_ref:   (P, OC)  f32 output
    acc = lax.dot_general(
        x_ref[...], w_ref[...],
        dimension_numbers=(((1,), (1,)), ((), ())),   # contract K on both: A @ B^T
        preferred_element_type=jnp.float32)
    o_ref[...] = (acc + pos_ref[...]).astype(o_ref.dtype)


def embeddings_forward(x, conv_w, conv_b, pos_emb):
    """x: (B, C, H, W) NCHW f32.  conv_w: (OC, C, 2, 2). conv_b: (OC,).
    pos_emb: (1, n_patches, OC).  Returns (B, n_patches, OC) f32."""
    B, C, H, W = x.shape
    OC = conv_w.shape[0]
    kh, kw = conv_w.shape[2], conv_w.shape[3]
    Hp, Wp = H // kh, W // kw
    P = Hp * Wp
    K = C * kh * kw

    # --- glue: patchify (matches conv with kernel_size == stride), bf16 cast ---
    xp = x.reshape(B, C, Hp, kh, Wp, kw)
    xp = xp.transpose(0, 2, 4, 1, 3, 5)                  # (B, Hp, Wp, C, kh, kw)
    patches = xp.reshape(B, P, K).astype(jnp.bfloat16)   # per-patch order (c, kh, kw)

    w_flat = conv_w.reshape(OC, K).astype(jnp.bfloat16)  # (OC, K): pure reshape, no .T
    pos_bias = (pos_emb.reshape(P, OC)
                + conv_b[None, :]).astype(jnp.float32)   # bias folded into pos

    out = pl.pallas_call(
        _embed_kernel,
        out_shape=jax.ShapeDtypeStruct((B, P, OC), jnp.float32),
        grid=(B,),
        in_specs=[
            pl.BlockSpec((None, P, K), lambda b: (b, 0, 0)),   # one batch of patches
            pl.BlockSpec((OC, K), lambda b: (0, 0)),           # weight: resident
            pl.BlockSpec((P, OC), lambda b: (0, 0)),           # pos+bias: resident
        ],
        out_specs=pl.BlockSpec((None, P, OC), lambda b: (b, 0, 0)),
        compiler_params=pltpu.CompilerParams(
            dimension_semantics=("parallel",)),
    )(patches, w_flat, pos_bias)

    return out


def _reference_forward(x, conv_w, conv_b, pos_emb):
    # Pure-JAX f32 reference using lax.conv (NCHW / OIHW), mirroring PyTorch.
    y = lax.conv_general_dilated(
        x, conv_w, window_strides=(2, 2), padding="VALID",
        dimension_numbers=("NCHW", "OIHW", "NCHW"))
    y = y + conv_b[None, :, None, None]
    B, OC, Hp, Wp = y.shape
    y = y.reshape(B, OC, Hp * Wp).transpose(0, 2, 1)   # (B, n_patches, OC)
    return y + pos_emb


if __name__ == "__main__":
    # img_size = (64, 64), down_factor = 4, patch_size = (2, 2)
    #   -> module input spatial = 64 / 2**4 = 4, n_patches = 2 * 2 = 4
    img_size = (64, 64)
    B, C, OC = 2, 256, 768
    H = img_size[0] // 16
    W = img_size[1] // 16
    n_patches = (H // 2) * (W // 2)

    key = jax.random.PRNGKey(0)
    kx, kwt, kb, kp = jax.random.split(key, 4)

    x = jax.random.normal(kx, (B, C, H, W), dtype=jnp.float32)
    # Deterministic synthetic parameter init (module would init pos_emb to zeros;
    # small random values exercise the position-add path).
    conv_w = jax.random.normal(kwt, (OC, C, 2, 2), dtype=jnp.float32) * 0.02
    conv_b = jax.random.normal(kb, (OC,), dtype=jnp.float32) * 0.02
    pos_emb = jax.random.normal(kp, (1, n_patches, OC), dtype=jnp.float32) * 0.02

    fwd = jax.jit(embeddings_forward)
    out = fwd(x, conv_w, conv_b, pos_emb)
    out = jax.block_until_ready(out)

    ref = _reference_forward(x, conv_w, conv_b, pos_emb)
    assert out.shape == (B, n_patches, OC), out.shape
    # bf16 inputs vs f32 conv reference -> loosened tolerance (per perf review).
    max_err = float(jnp.max(jnp.abs(out - ref)))
    assert jnp.allclose(out, ref, atol=5e-2, rtol=5e-2), max_err

    print("KERNEL_OK")
</pallas_src>

<mosaic_0001>
module attributes {stable_mosaic.version = 11 : i64} {
  func.func @_embed_kernel(%arg0: i32, %arg1: memref<1x4x1024xbf16, #tpu.memory_space<vmem>>, %arg2: memref<768x1024xbf16, #tpu.memory_space<vmem>>, %arg3: memref<4x768xf32, #tpu.memory_space<vmem>>, %arg4: memref<1x4x768xf32, #tpu.memory_space<vmem>>) attributes {dimension_semantics = [#tpu.dimension_semantics<parallel>], iteration_bounds = array<i64: 2>, scalar_prefetch = 0 : i64, scratch_operands = 0 : i64, tpu.core_type = #tpu.core_type<tc>, window_params = [{transform_indices = @transform_0, window_bounds = array<i64: 1, 4, 1024>}, {pipeline_mode = #tpu.pipeline_mode<synchronous>, transform_indices = @transform_1, window_bounds = array<i64: 768, 1024>}, {pipeline_mode = #tpu.pipeline_mode<synchronous>, transform_indices = @transform_2, window_bounds = array<i64: 4, 768>}, {transform_indices = @transform_3, window_bounds = array<i64: 1, 4, 768>}]} {
    %c0 = arith.constant 0 : index
    %c0_0 = arith.constant 0 : index
    %c0_1 = arith.constant 0 : index
    %0 = vector.load %arg1[%c0, %c0_0, %c0_1] : memref<1x4x1024xbf16, #tpu.memory_space<vmem>>, vector<1x4x1024xbf16>
    %1 = vector.shape_cast %0 : vector<1x4x1024xbf16> to vector<4x1024xbf16>
    %c0_2 = arith.constant 0 : index
    %c0_3 = arith.constant 0 : index
    %2 = vector.load %arg2[%c0_2, %c0_3] : memref<768x1024xbf16, #tpu.memory_space<vmem>>, vector<768x1024xbf16>
    %cst = arith.constant dense<0.000000e+00> : vector<4x768xf32>
    %3 = tpu.matmul %1, %2, %cst {dimension_numbers = #tpu.dot_dimension_numbers<[1], [1], [0], [0], [0, 0, 1, 0], [], []>} : vector<4x1024xbf16>, vector<768x1024xbf16>, vector<4x768xf32> -> vector<4x768xf32>
    %c0_4 = arith.constant 0 : index
    %c0_5 = arith.constant 0 : index
    %4 = vector.load %arg3[%c0_4, %c0_5] : memref<4x768xf32, #tpu.memory_space<vmem>>, vector<4x768xf32>
    %5 = arith.addf %3, %4 : vector<4x768xf32>
    %c0_6 = arith.constant 0 : index
    %c0_7 = arith.constant 0 : index
    %c0_8 = arith.constant 0 : index
    %6 = vector.load %arg4[%c0_6, %c0_7, %c0_8] : memref<1x4x768xf32, #tpu.memory_space<vmem>>, vector<1x4x768xf32>
    %7 = vector.shape_cast %6 : vector<1x4x768xf32> to vector<4x768xf32>
    %8 = vector.shape_cast %5 : vector<4x768xf32> to vector<1x4x768xf32>
    tpu.vector_store %arg4[%c0_6, %c0_7, %c0_8], %8 {strides = array<i32>} : memref<1x4x768xf32, #tpu.memory_space<vmem>>, vector<1x4x768xf32>,
    return
  }
  func.func @transform_0(%arg0: i32) -> (i32, i32, i32) {
    %c0_i32 = arith.constant 0 : i32
    %c0_i32_0 = arith.constant 0 : i32
    %c0_i32_1 = arith.constant 0 : i32
    return %arg0, %c0_i32, %c0_i32_0 : i32, i32, i32
  }
  func.func @transform_1(%arg0: i32) -> (i32, i32) {
    %c0_i32 = arith.constant 0 : i32
    %c0_i32_0 = arith.constant 0 : i32
    %c0_i32_1 = arith.constant 0 : i32
    return %c0_i32, %c0_i32_0 : i32, i32
  }
  func.func @transform_2(%arg0: i32) -> (i32, i32) {
    %c0_i32 = arith.constant 0 : i32
    %c0_i32_0 = arith.constant 0 : i32
    %c0_i32_1 = arith.constant 0 : i32
    return %c0_i32, %c0_i32_0 : i32, i32
  }
  func.func @transform_3(%arg0: i32) -> (i32, i32, i32) {
    %c0_i32 = arith.constant 0 : i32
    %c0_i32_0 = arith.constant 0 : i32
    %c0_i32_1 = arith.constant 0 : i32
    return %arg0, %c0_i32, %c0_i32_0 : i32, i32, i32
  }
}

</mosaic_0001>

<llo_original>
// kernel: embeddings_forward.1
$region0: #{embeddings_forward.1}
  #allocation0 [shape = 'u32[]', space=smem, size = 0x4, offset = 0x4, fixed_abs, tag = 'smem constant byte address 0x4 - core index']
  #allocation1 [shape = 'u32[144,128]{1,0:T(1,128)}', space=vmem, size = 0x12000, scoped, tag = 'internal scratch']
  %s0 = inlined_call_operand.vmem [shape: bf16[2,4,1024], index: 0, kind: input, shape index: {}]
  %s1 = inlined_call_operand.vmem [shape: bf16[768,1024], index: 1, kind: input, shape index: {}]
  %s2 = inlined_call_operand.vmem [shape: f32[4,768], index: 2, kind: input, shape index: {}]
  %s3 = inlined_call_operand.hbm [shape: f32[2,4,768], index: 3, kind: output, shape index: {}]
  %s4 = sld [smem:[#allocation0]]
  $region45: #{embeddings_forward.1} parent=0
    _
  %s6 = ssub.s32 1, %s4
  %s7 = scalar_select 0, %s6, %s4
  $region1: #{embeddings_forward.1} parent=0
    #allocation2 [shape = 'u8[24576]{0}', space=vmem, size = 0x6000, scoped, tag = 'output window, operand 0']
    #allocation3 [shape = 's32[2]{0}', space=sflag, size = 0x8, scoped, tag = 'scoped memory for embeddings_forward.1']
    %8 = vsyncpa [#allocation3], 0
    %s9 = scalar_lea.sflag [#allocation3], 1
    %10 = vsyncpa %s9, 0
    loop: start=0, step=1, limit=4
    $region2: #{embeddings_forward.1} parent=1 // loop_pre_header
      _
    $region3: #{embeddings_forward.1} parent=1 // loop_header
      %s12 = sphi 0, %s16
      %p13 = scmp.ge.s32.totalorder %s12, 4
      %s22 = sphi 0, %s24
      %s25 = sphi 0, %s22
      %s26 = sphi 0, %s25
      %s42 = sphi 0, %s26
      %s46 = sphi 0, %s46
      %s48 = sphi 0, %s46
      %s49 = sphi 0, %s48
      %s63 = sphi 0, %s49
      %s67 = sphi 0, %s67
      %s69 = sphi 0, %s67
      %s70 = sphi 0, %s69
      %s84 = sphi 0, %s70
      %s90 = sphi 0, %s92
      %s93 = sphi 0, %s90
      %s94 = sphi 0, %s93
      %s110 = sphi 0, %s94
    $region4: #{embeddings_forward.1} parent=1 // loop_header_branch
      %15 = sbr.rel (%p13) target = $region8
    $region5: #{embeddings_forward.1} parent=1 // loop_body
      %s17 = ssub.s32 %s12, 1
      %s18 = ssub.s32 %s12, 2
      %s19 = sadd.s32 %s12, 1
      %s20 = ssub.s32 %s12, %s19
      %p21 = scmp.eq.s32.totalorder %s20, 0
      %s23 = sadd.s32 %s22, 1
      %s24 = scalar_select %p21, %s22, %s23
      %p27 = pneg %p21
      %p28 = scmp.eq.s32.totalorder %s12, 1
      %p29 = por %p27, %p28
      %p30 = scmp.ne.s32.totalorder %s22, %s25
      %p31 = scmp.eq.s32.totalorder %s12, 0
      %p32 = por %p30, %p31
      %p33 = scmp.ne.s32.totalorder %s22, %s25
      %p34 = scmp.eq.s32.totalorder %s17, 1
      %p35 = por %p33, %p34
      %p36 = scmp.ne.s32.totalorder %s25, %s26
      %p37 = scmp.eq.s32.totalorder %s17, 0
      %p38 = por %p36, %p37
      %p39 = scmp.ne.s32.totalorder %s25, %s26
      %p40 = scmp.eq.s32.totalorder %s18, 1
      %p41 = por %p39, %p40
      %p43 = scmp.ne.s32.totalorder %s26, %s42
      %p44 = scmp.eq.s32.totalorder %s18, 0
      %p45 = por %p43, %p44
      %s47 = sadd.s32 %s46, 1
      %p50 = scmp.eq.s32.totalorder %s12, 1
      %p51 = scmp.ne.s32.totalorder %s46, %s48
      %p52 = scmp.eq.s32.totalorder %s12, 0
      %p53 = por %p51, %p52
      %p54 = scmp.ne.s32.totalorder %s46, %s48
      %p55 = scmp.eq.s32.totalorder %s17, 1
      %p56 = por %p54, %p55
      %p57 = scmp.ne.s32.totalorder %s48, %s49
      %p58 = scmp.eq.s32.totalorder %s17, 0
      %p59 = por %p57, %p58
      %p60 = scmp.ne.s32.totalorder %s48, %s49
      %p61 = scmp.eq.s32.totalorder %s18, 1
      %p62 = por %p60, %p61
      %p64 = scmp.ne.s32.totalorder %s49, %s63
      %p65 = scmp.eq.s32.totalorder %s18, 0
      %p66 = por %p64, %p65
      %s68 = sadd.s32 %s67, 1
      %p71 = scmp.eq.s32.totalorder %s12, 1
      %p72 = scmp.ne.s32.totalorder %s67, %s69
      %p73 = scmp.eq.s32.totalorder %s12, 0
      %p74 = por %p72, %p73
      %p75 = scmp.ne.s32.totalorder %s67, %s69
      %p76 = scmp.eq.s32.totalorder %s17, 1
      %p77 = por %p75, %p76
      %p78 = scmp.ne.s32.totalorder %s69, %s70
      %p79 = scmp.eq.s32.totalorder %s17, 0
      %p80 = por %p78, %p79
      %p81 = scmp.ne.s32.totalorder %s69, %s70
      %p82 = scmp.eq.s32.totalorder %s18, 1
      %p83 = por %p81, %p82
      %p85 = scmp.ne.s32.totalorder %s70, %s84
      %p86 = scmp.eq.s32.totalorder %s18, 0
      %p87 = por %p85, %p86
      %s88 = ssub.s32 %s12, %s19
      %p89 = scmp.eq.s32.totalorder %s88, 0
      %s91 = sadd.s32 %s90, 1
      %s92 = scalar_select %p89, %s90, %s91
      %p95 = pneg %p89
      %p96 = scmp.eq.s32.totalorder %s12, 1
      %p97 = por %p95, %p96
      %p98 = scmp.ne.s32.totalorder %s90, %s93
      %p99 = scmp.eq.s32.totalorder %s12, 0
      %p100 = por %p98, %p99
      %p101 = scmp.ne.s32.totalorder %s90, %s93
      %p102 = scmp.eq.s32.totalorder %s17, 1
      %p103 = por %p101, %p102
      %p104 = scmp.ne.s32.totalorder %s93, %s94
      %p105 = scmp.eq.s32.totalorder %s17, 0
      %p106 = por %p104, %p105
      %p107 = scmp.ne.s32.totalorder %s93, %s94
      %p108 = scmp.eq.s32.totalorder %s18, 1
      %p109 = por %p107, %p108
      %p111 = scmp.ne.s32.totalorder %s94, %s110
      %p112 = scmp.eq.s32.totalorder %s18, 0
      %p113 = por %p111, %p112
      %p114 = scmp.le.s32.totalorder 1, %s12
      %p115 = scmp.lt.s32.totalorder %s12, 3
      %p116 = pnand %p114, %p115
      %p117 = pneg %p116
      // Predicated region
      $region9: #{embeddings_forward.1} parent=5 // pred_check
        _
      $region10: #{embeddings_forward.1} parent=5 // pred_check_branch
        %119 = sbr.rel (%p116) target = $region12
      $region11: #{embeddings_forward.1} parent=5 // pred_region
        %s120 = ssub.s32 %s12, 1
        // Predicated region
        $region13: #{embeddings_forward.1} parent=11 // pred_check
          %p121 = pneg %p59
        $region14: #{embeddings_forward.1} parent=11 // pred_check_branch
          %123 = sbr.rel (%p121) target = $region16
        $region15: #{embeddings_forward.1} parent=11 // pred_region
          _
        $region16: #{embeddings_forward.1} parent=11 // pred_fallthru
          _
        // Predicated region
        $region17: #{embeddings_forward.1} parent=11 // pred_check
          %p124 = pneg %p80
        $region18: #{embeddings_forward.1} parent=11 // pred_check_branch
          %126 = sbr.rel (%p124) target = $region20
        $region19: #{embeddings_forward.1} parent=11 // pred_region
          _
        $region20: #{embeddings_forward.1} parent=11 // pred_fallthru
          _
      $region12: #{embeddings_forward.1} parent=5 // pred_fallthru
        _
      %p127 = scmp.lt.s32.totalorder %s12, 2
      // Predicated region
      $region21: #{embeddings_forward.1} parent=5 // pred_check
        %p128 = pneg %p127
      $region22: #{embeddings_forward.1} parent=5 // pred_check_branch
        %130 = sbr.rel (%p128) target = $region24
      $region23: #{embeddings_forward.1} parent=5 // pred_region
        // Predicated region
        $region25: #{embeddings_forward.1} parent=23 // pred_check
          %p131 = pneg %p32
        $region26: #{embeddings_forward.1} parent=23 // pred_check_branch
          %133 = sbr.rel (%p131) target = $region28
        $region27: #{embeddings_forward.1} parent=23 // pred_region
          %p134 = scmp.lt.s32.totalorder %s12, 1
          %s135 = scalar_select %p134, %s12, 1
          %s136 = smul.addr %s135, 8
          %s137 = smul.addr %s136, 2
          %s138 = scalar_lea.vmem %s0, %s137
        $region28: #{embeddings_forward.1} parent=23 // pred_fallthru
          _
      $region24: #{embeddings_forward.1} parent=5 // pred_fallthru
        _
      %p139 = scmp.le.s32.totalorder 1, %s12
      %p140 = scmp.lt.s32.totalorder %s12, 3
      %p141 = pnand %p139, %p140
      %p142 = pneg %p141
      // Predicated region
      $region29: #{embeddings_forward.1} parent=5 // pred_check
        _
      $region30: #{embeddings_forward.1} parent=5 // pred_check_branch
        %144 = sbr.rel (%p141) target = $region32
      $region31: #{embeddings_forward.1} parent=5 // pred_region
        %s145 = ssub.s32 %s12, 1
        %p146 = scmp.lt.s32.totalorder %s17, 1
        %s147 = scalar_select %p146, %s17, 1
        %s148 = smul.addr %s147, 8
        %s149 = smul.addr %s148, 2
        %s150 = scalar_lea.vmem %s0, %s149
        %p151 = pneg %p38
        %p152 = pneg %p35
        %p153 = pneg %p59
        %p154 = pneg %p56
        %p155 = pneg %p80
        %p156 = pneg %p77
        %p157 = pneg %p106
        %p158 = pneg %p103
        %s159 = sand.u32 %s93, 1
        %s160 = scalar_lea.sflag [#allocation3], %s159
        %s161 = sand.u32 %s93, 1
        %s162 = smul.addr %s161, 24
        %s163 = scalar_lea.vmem [#allocation2], %s162
        %p164 = scmp.lt.s32.totalorder %s17, 1
        %s165 = scalar_select %p164, %s17, 1
        %s166 = smul.addr %s165, 8
        %s167 = smul.addr %s166, 2
        %s168 = scalar_lea.vmem %s0, %s167
        %v169 = vld [vmem:[%s168] sm:$0xff]
        %v170 = vld [vmem:[%s168 + $0x8] sm:$0xff]
        %v171 = vld [vmem:[%s1] sm:$0xff]
        %v172 = vld [vmem:[%s1 + $0x8] sm:$0xff]
        %v173 = vld [vmem:[%s1 + $0x10] sm:$0xff]
        %v174 = vld [vmem:[%s1 + $0x18] sm:$0xff]
        %v175 = vld [vmem:[%s1 + $0x20] sm:$0xff]
        %v176 = vld [vmem:[%s1 + $0x28] sm:$0xff]
        %v177 = vld [vmem:[%s1 + $0x30] sm:$0xff]
        %v178 = vld [vmem:[%s1 + $0x38] sm:$0xff]
        %v179 = vld [vmem:[%s1 + $0x40] sm:$0xff]
        %v180 = vld [vmem:[%s1 + $0x48] sm:$0xff]
        %v181 = vld [vmem:[%s1 + $0x50] sm:$0xff]
        %v182 = vld [vmem:[%s1 + $0x58] sm:$0xff]
        %v183 = vld [vmem:[%s1 + $0x60] sm:$0xff]
        %v184 = vld [vmem:[%s1 + $0x68] sm:$0xff]
        %v185 = vld [vmem:[%s1 + $0x70] sm:$0xff]
        %v186 = vld [vmem:[%s1 + $0x78] sm:$0xff]
        %v187 = vld [vmem:[%s1 + $0x80] sm:$0xff]
        %v188 = vld [vmem:[%s1 + $0x88] sm:$0xff]
        %v189 = vld [vmem:[%s1 + $0x90] sm:$0xff]
        %v190 = vld [vmem:[%s1 + $0x98] sm:$0xff]
        %v191 = vld [vmem:[%s1 + $0xa0] sm:$0xff]
        %v192 = vld [vmem:[%s1 + $0xa8] sm:$0xff]
        %v193 = vld [vmem:[%s1 + $0xb0] sm:$0xff]
        %v194 = vld [vmem:[%s1 + $0xb8] sm:$0xff]
        %v195 = vld [vmem:[%s1 + $0xc0] sm:$0xff]
        %v196 = vld [vmem:[%s1 + $0xc8] sm:$0xff]
        %v197 = vld [vmem:[%s1 + $0xd0] sm:$0xff]
        %v198 = vld [vmem:[%s1 + $0xd8] sm:$0xff]
        %v199 = vld [vmem:[%s1 + $0xe0] sm:$0xff]
        %v200 = vld [vmem:[%s1 + $0xe8] sm:$0xff]
        %v201 = vld [vmem:[%s1 + $0xf0] sm:$0xff]
        %v202 = vld [vmem:[%s1 + $0xf8] sm:$0xff]
        %v203 = vld [vmem:[%s1 + $0x100] sm:$0xff]
        %v204 = vld [vmem:[%s1 + $0x108] sm:$0xff]
        %v205 = vld [vmem:[%s1 + $0x110] sm:$0xff]
        %v206 = vld [vmem:[%s1 + $0x118] sm:$0xff]
        %v207 = vld [vmem:[%s1 + $0x120] sm:$0xff]
        %v208 = vld [vmem:[%s1 + $0x128] sm:$0xff]
        %v209 = vld [vmem:[%s1 + $0x130] sm:$0xff]
        %v210 = vld [vmem:[%s1 + $0x138] sm:$0xff]
        %v211 = vld [vmem:[%s1 + $0x140] sm:$0xff]
        %v212 = vld [vmem:[%s1 + $0x148] sm:$0xff]
        %v213 = vld [vmem:[%s1 + $0x150] sm:$0xff]
        %v214 = vld [vmem:[%s1 + $0x158] sm:$0xff]
        %v215 = vld [vmem:[%s1 + $0x160] sm:$0xff]
        %v216 = vld [vmem:[%s1 + $0x168] sm:$0xff]
        %v217 = vld [vmem:[%s1 + $0x170] sm:$0xff]
        %v218 = vld [vmem:[%s1 + $0x178] sm:$0xff]
        %v219 = vld [vmem:[%s1 + $0x180] sm:$0xff]
        %v220 = vld [vmem:[%s1 + $0x188] sm:$0xff]
        %v221 = vld [vmem:[%s1 + $0x190] sm:$0xff]
        %v222 = vld [vmem:[%s1 + $0x198] sm:$0xff]
        %v223 = vld [vmem:[%s1 + $0x1a0] sm:$0xff]
        %v224 = vld [vmem:[%s1 + $0x1a8] sm:$0xff]
        %v225 = vld [vmem:[%s1 + $0x1b0] sm:$0xff]
        %v226 = vld [vmem:[%s1 + $0x1b8] sm:$0xff]
        %v227 = vld [vmem:[%s1 + $0x1c0] sm:$0xff]
        %v228 = vld [vmem:[%s1 + $0x1c8] sm:$0xff]
        %v229 = vld [vmem:[%s1 + $0x1d0] sm:$0xff]
        %v230 = vld [vmem:[%s1 + $0x1d8] sm:$0xff]
        %v231 = vld [vmem:[%s1 + $0x1e0] sm:$0xff]
        %v232 = vld [vmem:[%s1 + $0x1e8] sm:$0xff]
        %v233 = vld [vmem:[%s1 + $0x1f0] sm:$0xff]
        %v234 = vld [vmem:[%s1 + $0x1f8] sm:$0xff]
        %v235 = vld [vmem:[%s1 + $0x200] sm:$0xff]
        %v236 = vld [vmem:[%s1 + $0x208] sm:$0xff]
        %v237 = vld [vmem:[%s1 + $0x210] sm:$0xff]
        %v238 = vld [vmem:[%s1 + $0x218] sm:$0xff]
        %v239 = vld [vmem:[%s1 + $0x220] sm:$0xff]
        %v240 = vld [vmem:[%s1 + $0x228] sm:$0xff]
        %v241 = vld [vmem:[%s1 + $0x230] sm:$0xff]
        %v242 = vld [vmem:[%s1 + $0x238] sm:$0xff]
        %v243 = vld [vmem:[%s1 + $0x240] sm:$0xff]
        %v244 = vld [vmem:[%s1 + $0x248] sm:$0xff]
        %v245 = vld [vmem:[%s1 + $0x250] sm:$0xff]
        %v246 = vld [vmem:[%s1 + $0x258] sm:$0xff]
        %v247 = vld [vmem:[%s1 + $0x260] sm:$0xff]
        %v248 = vld [vmem:[%s1 + $0x268] sm:$0xff]
        %v249 = vld [vmem:[%s1 + $0x270] sm:$0xff]
        %v250 = vld [vmem:[%s1 + $0x278] sm:$0xff]
        %v251 = vld [vmem:[%s1 + $0x280] sm:$0xff]
        %v252 = vld [vmem:[%s1 + $0x288] sm:$0xff]
        %v253 = vld [vmem:[%s1 + $0x290] sm:$0xff]
        %v254 = vld [vmem:[%s1 + $0x298] sm:$0xff]
        %v255 = vld [vmem:[%s1 + $0x2a0] sm:$0xff]
        %v256 = vld [vmem:[%s1 + $0x2a8] sm:$0xff]
        %v257 = vld [vmem:[%s1 + $0x2b0] sm:$0xff]
        %v258 = vld [vmem:[%s1 + $0x2b8] sm:$0xff]
        %v259 = vld [vmem:[%s1 + $0x2c0] sm:$0xff]
        %v260 = vld [vmem:[%s1 + $0x2c8] sm:$0xff]
        %v261 = vld [vmem:[%s1 + $0x2d0] sm:$0xff]
        %v262 = vld [vmem:[%s1 + $0x2d8] sm:$0xff]
        %v263 = vld [vmem:[%s1 + $0x2e0] sm:$0xff]
        %v264 = vld [vmem:[%s1 + $0x2e8] sm:$0xff]
        %v265 = vld [vmem:[%s1 + $0x2f0] sm:$0xff]
        %v266 = vld [vmem:[%s1 + $0x2f8] sm:$0xff]
        %v267 = vld [vmem:[%s1 + $0x300] sm:$0xff]
        %v268 = vld [vmem:[%s1 + $0x308] sm:$0xff]
        %v269 = vld [vmem:[%s1 + $0x310] sm:$0xff]
        %v270 = vld [vmem:[%s1 + $0x318] sm:$0xff]
        %v271 = vld [vmem:[%s1 + $0x320] sm:$0xff]
        %v272 = vld [vmem:[%s1 + $0x328] sm:$0xff]
        %v273 = vld [vmem:[%s1 + $0x330] sm:$0xff]
        %v274 = vld [vmem:[%s1 + $0x338] sm:$0xff]
        %v275 = vld [vmem:[%s1 + $0x340] sm:$0xff]
        %v276 = vld [vmem:[%s1 + $0x348] sm:$0xff]
        %v277 = vld [vmem:[%s1 + $0x350] sm:$0xff]
        %v278 = vld [vmem:[%s1 + $0x358] sm:$0xff]
        %v279 = vld [vmem:[%s1 + $0x360] sm:$0xff]
        %v280 = vld [vmem:[%s1 + $0x368] sm:$0xff]
        %v281 = vld [vmem:[%s1 + $0x370] sm:$0xff]
        %v282 = vld [vmem:[%s1 + $0x378] sm:$0xff]
        %v283 = vld [vmem:[%s1 + $0x380] sm:$0xff]
        %v284 = vld [vmem:[%s1 + $0x388] sm:$0xff]
        %v285 = vld [vmem:[%s1 + $0x390] sm:$0xff]
        %v286 = vld [vmem:[%s1 + $0x398] sm:$0xff]
        %v287 = vld [vmem:[%s1 + $0x3a0] sm:$0xff]
        %v288 = vld [vmem:[%s1 + $0x3a8] sm:$0xff]
        %v289 = vld [vmem:[%s1 + $0x3b0] sm:$0xff]
        %v290 = vld [vmem:[%s1 + $0x3b8] sm:$0xff]
        %v291 = vld [vmem:[%s1 + $0x3c0] sm:$0xff]
        %v292 = vld [vmem:[%s1 + $0x3c8] sm:$0xff]
        %v293 = vld [vmem:[%s1 + $0x3d0] sm:$0xff]
        %v294 = vld [vmem:[%s1 + $0x3d8] sm:$0xff]
        %v295 = vld [vmem:[%s1 + $0x3e0] sm:$0xff]
        %v296 = vld [vmem:[%s1 + $0x3e8] sm:$0xff]
        %v297 = vld [vmem:[%s1 + $0x3f0] sm:$0xff]
        %v298 = vld [vmem:[%s1 + $0x3f8] sm:$0xff]
        %v299 = vld [vmem:[%s1 + $0x400] sm:$0xff]
        %v300 = vld [vmem:[%s1 + $0x408] sm:$0xff]
        %v301 = vld [vmem:[%s1 + $0x410] sm:$0xff]
        %v302 = vld [vmem:[%s1 + $0x418] sm:$0xff]
        %v303 = vld [vmem:[%s1 + $0x420] sm:$0xff]
        %v304 = vld [vmem:[%s1 + $0x428] sm:$0xff]
        %v305 = vld [vmem:[%s1 + $0x430] sm:$0xff]
        %v306 = vld [vmem:[%s1 + $0x438] sm:$0xff]
        %v307 = vld [vmem:[%s1 + $0x440] sm:$0xff]
        %v308 = vld [vmem:[%s1 + $0x448] sm:$0xff]
        %v309 = vld [vmem:[%s1 + $0x450] sm:$0xff]
        %v310 = vld [vmem:[%s1 + $0x458] sm:$0xff]
        %v311 = vld [vmem:[%s1 + $0x460] sm:$0xff]
        %v312 = vld [vmem:[%s1 + $0x468] sm:$0xff]
        %v313 = vld [vmem:[%s1 + $0x470] sm:$0xff]
        %v314 = vld [vmem:[%s1 + $0x478] sm:$0xff]
        %v315 = vld [vmem:[%s1 + $0x480] sm:$0xff]
        %v316 = vld [vmem:[%s1 + $0x488] sm:$0xff]
        %v317 = vld [vmem:[%s1 + $0x490] sm:$0xff]
        %v318 = vld [vmem:[%s1 + $0x498] sm:$0xff]
        %v319 = vld [vmem:[%s1 + $0x4a0] sm:$0xff]
        %v320 = vld [vmem:[%s1 + $0x4a8] sm:$0xff]
        %v321 = vld [vmem:[%s1 + $0x4b0] sm:$0xff]
        %v322 = vld [vmem:[%s1 + $0x4b8] sm:$0xff]
        %v323 = vld [vmem:[%s1 + $0x4c0] sm:$0xff]
        %v324 = vld [vmem:[%s1 + $0x4c8] sm:$0xff]
        %v325 = vld [vmem:[%s1 + $0x4d0] sm:$0xff]
        %v326 = vld [vmem:[%s1 + $0x4d8] sm:$0xff]
        %v327 = vld [vmem:[%s1 + $0x4e0] sm:$0xff]
        %v328 = vld [vmem:[%s1 + $0x4e8] sm:$0xff]
        %v329 = vld [vmem:[%s1 + $0x4f0] sm:$0xff]
        %v330 = vld [vmem:[%s1 + $0x4f8] sm:$0xff]
        %v331 = vld [vmem:[%s1 + $0x500] sm:$0xff]
        %v332 = vld [vmem:[%s1 + $0x508] sm:$0xff]
        %v333 = vld [vmem:[%s1 + $0x510] sm:$0xff]
        %v334 = vld [vmem:[%s1 + $0x518] sm:$0xff]
        %v335 = vld [vmem:[%s1 + $0x520] sm:$0xff]
        %v336 = vld [vmem:[%s1 + $0x528] sm:$0xff]
        %v337 = vld [vmem:[%s1 + $0x530] sm:$0xff]
        %v338 = vld [vmem:[%s1 + $0x538] sm:$0xff]
        %v339 = vld [vmem:[%s1 + $0x540] sm:$0xff]
        %v340 = vld [vmem:[%s1 + $0x548] sm:$0xff]
        %v341 = vld [vmem:[%s1 + $0x550] sm:$0xff]
        %v342 = vld [vmem:[%s1 + $0x558] sm:$0xff]
        %v343 = vld [vmem:[%s1 + $0x560] sm:$0xff]
        %v344 = vld [vmem:[%s1 + $0x568] sm:$0xff]
        %v345 = vld [vmem:[%s1 + $0x570] sm:$0xff]
        %v346 = vld [vmem:[%s1 + $0x578] sm:$0xff]
        %v347 = vld [vmem:[%s1 + $0x580] sm:$0xff]
        %v348 = vld [vmem:[%s1 + $0x588] sm:$0xff]
        %v349 = vld [vmem:[%s1 + $0x590] sm:$0xff]
        %v350 = vld [vmem:[%s1 + $0x598] sm:$0xff]
        %v351 = vld [vmem:[%s1 + $0x5a0] sm:$0xff]
        %v352 = vld [vmem:[%s1 + $0x5a8] sm:$0xff]
        %v353 = vld [vmem:[%s1 + $0x5b0] sm:$0xff]
        %v354 = vld [vmem:[%s1 + $0x5b8] sm:$0xff]
        %v355 = vld [vmem:[%s1 + $0x5c0] sm:$0xff]
        %v356 = vld [vmem:[%s1 + $0x5c8] sm:$0xff]
        %v357 = vld [vmem:[%s1 + $0x5d0] sm:$0xff]
        %v358 = vld [vmem:[%s1 + $0x5d8] sm:$0xff]
        %v359 = vld [vmem:[%s1 + $0x5e0] sm:$0xff]
        %v360 = vld [vmem:[%s1 + $0x5e8] sm:$0xff]
        %v361 = vld [vmem:[%s1 + $0x5f0] sm:$0xff]
        %v362 = vld [vmem:[%s1 + $0x5f8] sm:$0xff]
        %v363 = vld [vmem:[%s1 + $0x600] sm:$0xff]
        %v364 = vld [vmem:[%s1 + $0x608] sm:$0xff]
        %v365 = vld [vmem:[%s1 + $0x610] sm:$0xff]
        %v366 = vld [vmem:[%s1 + $0x618] sm:$0xff]
        %v367 = vld [vmem:[%s1 + $0x620] sm:$0xff]
        %v368 = vld [vmem:[%s1 + $0x628] sm:$0xff]
        %v369 = vld [vmem:[%s1 + $0x630] sm:$0xff]
        %v370 = vld [vmem:[%s1 + $0x638] sm:$0xff]
        %v371 = vld [vmem:[%s1 + $0x640] sm:$0xff]
        %v372 = vld [vmem:[%s1 + $0x648] sm:$0xff]
        %v373 = vld [vmem:[%s1 + $0x650] sm:$0xff]
        %v374 = vld [vmem:[%s1 + $0x658] sm:$0xff]
        %v375 = vld [vmem:[%s1 + $0x660] sm:$0xff]
        %v376 = vld [vmem:[%s1 + $0x668] sm:$0xff]
        %v377 = vld [vmem:[%s1 + $0x670] sm:$0xff]
        %v378 = vld [vmem:[%s1 + $0x678] sm:$0xff]
        %v379 = vld [vmem:[%s1 + $0x680] sm:$0xff]
        %v380 = vld [vmem:[%s1 + $0x688] sm:$0xff]
        %v381 = vld [vmem:[%s1 + $0x690] sm:$0xff]
        %v382 = vld [vmem:[%s1 + $0x698] sm:$0xff]
        %v383 = vld [vmem:[%s1 + $0x6a0] sm:$0xff]
        %v384 = vld [vmem:[%s1 + $0x6a8] sm:$0xff]
        %v385 = vld [vmem:[%s1 + $0x6b0] sm:$0xff]
        %v386 = vld [vmem:[%s1 + $0x6b8] sm:$0xff]
        %v387 = vld [vmem:[%s1 + $0x6c0] sm:$0xff]
        %v388 = vld [vmem:[%s1 + $0x6c8] sm:$0xff]
        %v389 = vld [vmem:[%s1 + $0x6d0] sm:$0xff]
        %v390 = vld [vmem:[%s1 + $0x6d8] sm:$0xff]
        %v391 = vld [vmem:[%s1 + $0x6e0] sm:$0xff]
        %v392 = vld [vmem:[%s1 + $0x6e8] sm:$0xff]
        %v393 = vld [vmem:[%s1 + $0x6f0] sm:$0xff]
        %v394 = vld [vmem:[%s1 + $0x6f8] sm:$0xff]
        %v395 = vld [vmem:[%s1 + $0x700] sm:$0xff]
        %v396 = vld [vmem:[%s1 + $0x708] sm:$0xff]
        %v397 = vld [vmem:[%s1 + $0x710] sm:$0xff]
        %v398 = vld [vmem:[%s1 + $0x718] sm:$0xff]
        %v399 = vld [vmem:[%s1 + $0x720] sm:$0xff]
        %v400 = vld [vmem:[%s1 + $0x728] sm:$0xff]
        %v401 = vld [vmem:[%s1 + $0x730] sm:$0xff]
        %v402 = vld [vmem:[%s1 + $0x738] sm:$0xff]
        %v403 = vld [vmem:[%s1 + $0x740] sm:$0xff]
        %v404 = vld [vmem:[%s1 + $0x748] sm:$0xff]
        %v405 = vld [vmem:[%s1 + $0x750] sm:$0xff]
        %v406 = vld [vmem:[%s1 + $0x758] sm:$0xff]
        %v407 = vld [vmem:[%s1 + $0x760] sm:$0xff]
        %v408 = vld [vmem:[%s1 + $0x768] sm:$0xff]
        %v409 = vld [vmem:[%s1 + $0x770] sm:$0xff]
        %v410 = vld [vmem:[%s1 + $0x778] sm:$0xff]
        %v411 = vld [vmem:[%s1 + $0x780] sm:$0xff]
        %v412 = vld [vmem:[%s1 + $0x788] sm:$0xff]
        %v413 = vld [vmem:[%s1 + $0x790] sm:$0xff]
        %v414 = vld [vmem:[%s1 + $0x798] sm:$0xff]
        %v415 = vld [vmem:[%s1 + $0x7a0] sm:$0xff]
        %v416 = vld [vmem:[%s1 + $0x7a8] sm:$0xff]
        %v417 = vld [vmem:[%s1 + $0x7b0] sm:$0xff]
        %v418 = vld [vmem:[%s1 + $0x7b8] sm:$0xff]
        %v419 = vld [vmem:[%s1 + $0x7c0] sm:$0xff]
        %v420 = vld [vmem:[%s1 + $0x7c8] sm:$0xff]
        %v421 = vld [vmem:[%s1 + $0x7d0] sm:$0xff]
        %v422 = vld [vmem:[%s1 + $0x7d8] sm:$0xff]
        %v423 = vld [vmem:[%s1 + $0x7e0] sm:$0xff]
        %v424 = vld [vmem:[%s1 + $0x7e8] sm:$0xff]
        %v425 = vld [vmem:[%s1 + $0x7f0] sm:$0xff]
        %v426 = vld [vmem:[%s1 + $0x7f8] sm:$0xff]
        %v427 = vld [vmem:[%s1 + $0x800] sm:$0xff]
        %v428 = vld [vmem:[%s1 + $0x808] sm:$0xff]
        %v429 = vld [vmem:[%s1 + $0x810] sm:$0xff]
        %v430 = vld [vmem:[%s1 + $0x818] sm:$0xff]
        %v431 = vld [vmem:[%s1 + $0x820] sm:$0xff]
        %v432 = vld [vmem:[%s1 + $0x828] sm:$0xff]
        %v433 = vld [vmem:[%s1 + $0x830] sm:$0xff]
        %v434 = vld [vmem:[%s1 + $0x838] sm:$0xff]
        %v435 = vld [vmem:[%s1 + $0x840] sm:$0xff]
        %v436 = vld [vmem:[%s1 + $0x848] sm:$0xff]
        %v437 = vld [vmem:[%s1 + $0x850] sm:$0xff]
        %v438 = vld [vmem:[%s1 + $0x858] sm:$0xff]
        %v439 = vld [vmem:[%s1 + $0x860] sm:$0xff]
        %v440 = vld [vmem:[%s1 + $0x868] sm:$0xff]
        %v441 = vld [vmem:[%s1 + $0x870] sm:$0xff]
        %v442 = vld [vmem:[%s1 + $0x878] sm:$0xff]
        %v443 = vld [vmem:[%s1 + $0x880] sm:$0xff]
        %v444 = vld [vmem:[%s1 + $0x888] sm:$0xff]
        %v445 = vld [vmem:[%s1 + $0x890] sm:$0xff]
        %v446 = vld [vmem:[%s1 + $0x898] sm:$0xff]
        %v447 = vld [vmem:[%s1 + $0x8a0] sm:$0xff]
        %v448 = vld [vmem:[%s1 + $0x8a8] sm:$0xff]
        %v449 = vld [vmem:[%s1 + $0x8b0] sm:$0xff]
        %v450 = vld [vmem:[%s1 + $0x8b8] sm:$0xff]
        %v451 = vld [vmem:[%s1 + $0x8c0] sm:$0xff]
        %v452 = vld [vmem:[%s1 + $0x8c8] sm:$0xff]
        %v453 = vld [vmem:[%s1 + $0x8d0] sm:$0xff]
        %v454 = vld [vmem:[%s1 + $0x8d8] sm:$0xff]
        %v455 = vld [vmem:[%s1 + $0x8e0] sm:$0xff]
        %v456 = vld [vmem:[%s1 + $0x8e8] sm:$0xff]
        %v457 = vld [vmem:[%s1 + $0x8f0] sm:$0xff]
        %v458 = vld [vmem:[%s1 + $0x8f8] sm:$0xff]
        %v459 = vld [vmem:[%s1 + $0x900] sm:$0xff]
        %v460 = vld [vmem:[%s1 + $0x908] sm:$0xff]
        %v461 = vld [vmem:[%s1 + $0x910] sm:$0xff]
        %v462 = vld [vmem:[%s1 + $0x918] sm:$0xff]
        %v463 = vld [vmem:[%s1 + $0x920] sm:$0xff]
        %v464 = vld [vmem:[%s1 + $0x928] sm:$0xff]
        %v465 = vld [vmem:[%s1 + $0x930] sm:$0xff]
        %v466 = vld [vmem:[%s1 + $0x938] sm:$0xff]
        %v467 = vld [vmem:[%s1 + $0x940] sm:$0xff]
        %v468 = vld [vmem:[%s1 + $0x948] sm:$0xff]
        %v469 = vld [vmem:[%s1 + $0x950] sm:$0xff]
        %v470 = vld [vmem:[%s1 + $0x958] sm:$0xff]
        %v471 = vld [vmem:[%s1 + $0x960] sm:$0xff]
        %v472 = vld [vmem:[%s1 + $0x968] sm:$0xff]
        %v473 = vld [vmem:[%s1 + $0x970] sm:$0xff]
        %v474 = vld [vmem:[%s1 + $0x978] sm:$0xff]
        %v475 = vld [vmem:[%s1 + $0x980] sm:$0xff]
        %v476 = vld [vmem:[%s1 + $0x988] sm:$0xff]
        %v477 = vld [vmem:[%s1 + $0x990] sm:$0xff]
        %v478 = vld [vmem:[%s1 + $0x998] sm:$0xff]
        %v479 = vld [vmem:[%s1 + $0x9a0] sm:$0xff]
        %v480 = vld [vmem:[%s1 + $0x9a8] sm:$0xff]
        %v481 = vld [vmem:[%s1 + $0x9b0] sm:$0xff]
        %v482 = vld [vmem:[%s1 + $0x9b8] sm:$0xff]
        %v483 = vld [vmem:[%s1 + $0x9c0] sm:$0xff]
        %v484 = vld [vmem:[%s1 + $0x9c8] sm:$0xff]
        %v485 = vld [vmem:[%s1 + $0x9d0] sm:$0xff]
        %v486 = vld [vmem:[%s1 + $0x9d8] sm:$0xff]
        %v487 = vld [vmem:[%s1 + $0x9e0] sm:$0xff]
        %v488 = vld [vmem:[%s1 + $0x9e8] sm:$0xff]
        %v489 = vld [vmem:[%s1 + $0x9f0] sm:$0xff]
        %v490 = vld [vmem:[%s1 + $0x9f8] sm:$0xff]
        %v491 = vld [vmem:[%s1 + $0xa00] sm:$0xff]
        %v492 = vld [vmem:[%s1 + $0xa08] sm:$0xff]
        %v493 = vld [vmem:[%s1 + $0xa10] sm:$0xff]
        %v494 = vld [vmem:[%s1 + $0xa18] sm:$0xff]
        %v495 = vld [vmem:[%s1 + $0xa20] sm:$0xff]
        %v496 = vld [vmem:[%s1 + $0xa28] sm:$0xff]
        %v497 = vld [vmem:[%s1 + $0xa30] sm:$0xff]
        %v498 = vld [vmem:[%s1 + $0xa38] sm:$0xff]
        %v499 = vld [vmem:[%s1 + $0xa40] sm:$0xff]
        %v500 = vld [vmem:[%s1 + $0xa48] sm:$0xff]
        %v501 = vld [vmem:[%s1 + $0xa50] sm:$0xff]
        %v502 = vld [vmem:[%s1 + $0xa58] sm:$0xff]
        %v503 = vld [vmem:[%s1 + $0xa60] sm:$0xff]
        %v504 = vld [vmem:[%s1 + $0xa68] sm:$0xff]
        %v505 = vld [vmem:[%s1 + $0xa70] sm:$0xff]
        %v506 = vld [vmem:[%s1 + $0xa78] sm:$0xff]
        %v507 = vld [vmem:[%s1 + $0xa80] sm:$0xff]
        %v508 = vld [vmem:[%s1 + $0xa88] sm:$0xff]
        %v509 = vld [vmem:[%s1 + $0xa90] sm:$0xff]
        %v510 = vld [vmem:[%s1 + $0xa98] sm:$0xff]
        %v511 = vld [vmem:[%s1 + $0xaa0] sm:$0xff]
        %v512 = vld [vmem:[%s1 + $0xaa8] sm:$0xff]
        %v513 = vld [vmem:[%s1 + $0xab0] sm:$0xff]
        %v514 = vld [vmem:[%s1 + $0xab8] sm:$0xff]
        %v515 = vld [vmem:[%s1 + $0xac0] sm:$0xff]
        %v516 = vld [vmem:[%s1 + $0xac8] sm:$0xff]
        %v517 = vld [vmem:[%s1 + $0xad0] sm:$0xff]
        %v518 = vld [vmem:[%s1 + $0xad8] sm:$0xff]
        %v519 = vld [vmem:[%s1 + $0xae0] sm:$0xff]
        %v520 = vld [vmem:[%s1 + $0xae8] sm:$0xff]
        %v521 = vld [vmem:[%s1 + $0xaf0] sm:$0xff]
        %v522 = vld [vmem:[%s1 + $0xaf8] sm:$0xff]
        %v523 = vld [vmem:[%s1 + $0xb00] sm:$0xff]
        %v524 = vld [vmem:[%s1 + $0xb08] sm:$0xff]
        %v525 = vld [vmem:[%s1 + $0xb10] sm:$0xff]
        %v526 = vld [vmem:[%s1 + $0xb18] sm:$0xff]
        %v527 = vld [vmem:[%s1 + $0xb20] sm:$0xff]
        %v528 = vld [vmem:[%s1 + $0xb28] sm:$0xff]
        %v529 = vld [vmem:[%s1 + $0xb30] sm:$0xff]
        %v530 = vld [vmem:[%s1 + $0xb38] sm:$0xff]
        %v531 = vld [vmem:[%s1 + $0xb40] sm:$0xff]
        %v532 = vld [vmem:[%s1 + $0xb48] sm:$0xff]
        %v533 = vld [vmem:[%s1 + $0xb50] sm:$0xff]
        %v534 = vld [vmem:[%s1 + $0xb58] sm:$0xff]
        %v535 = vld [vmem:[%s1 + $0xb60] sm:$0xff]
        %v536 = vld [vmem:[%s1 + $0xb68] sm:$0xff]
        %v537 = vld [vmem:[%s1 + $0xb70] sm:$0xff]
        %v538 = vld [vmem:[%s1 + $0xb78] sm:$0xff]
        %v539 = vld [vmem:[%s1 + $0xb80] sm:$0xff]
        %v540 = vld [vmem:[%s1 + $0xb88] sm:$0xff]
        %v541 = vld [vmem:[%s1 + $0xb90] sm:$0xff]
        %v542 = vld [vmem:[%s1 + $0xb98] sm:$0xff]
        %v543 = vld [vmem:[%s1 + $0xba0] sm:$0xff]
        %v544 = vld [vmem:[%s1 + $0xba8] sm:$0xff]
        %v545 = vld [vmem:[%s1 + $0xbb0] sm:$0xff]
        %v546 = vld [vmem:[%s1 + $0xbb8] sm:$0xff]
        %v547 = vld [vmem:[%s1 + $0xbc0] sm:$0xff]
        %v548 = vld [vmem:[%s1 + $0xbc8] sm:$0xff]
        %v549 = vld [vmem:[%s1 + $0xbd0] sm:$0xff]
        %v550 = vld [vmem:[%s1 + $0xbd8] sm:$0xff]
        %v551 = vld [vmem:[%s1 + $0xbe0] sm:$0xff]
        %v552 = vld [vmem:[%s1 + $0xbe8] sm:$0xff]
        %v553 = vld [vmem:[%s1 + $0xbf0] sm:$0xff]
        %v554 = vld [vmem:[%s1 + $0xbf8] sm:$0xff]
        %v555 = vld [vmem:[%s2] sm:$0xff]
        %v556 = vld [vmem:[%s2 + $0x8] sm:$0xff]
        %v557 = vld [vmem:[%s2 + $0x10] sm:$0xff]
        %v560 = vcombine.high %v169, %v169
        %v562 = vunpack.c.l.s4 1983009808
        %v563 = vunpack.c.0.s8 %v562
        %v564 = vlaneseq
        %v565 = vshrl.u32 %v564, 7
        %v566 = vsub.s32 %v563, %v565
        %v567 = vrot.slane %v169, %v566
        %v569 = vunpack.c.l.s4 1983009808
        %v570 = vunpack.c.0.s8 %v569
        %v571 = vlaneseq
        %v572 = vshrl.u32 %v571, 7
        %v573 = vsub.s32 %v570, %v572
        %v574 = vrot.slane %v560, %v573
        %v575 = vcombine.high %v567, %v567
        %v576 = vcombine.high %v574, %v574
        %v577 = vcombine.high %v170, %v170
        %v579 = vunpack.c.l.s4 1983009808
        %v580 = vunpack.c.0.s8 %v579
        %v581 = vlaneseq
        %v582 = vshrl.u32 %v581, 7
        %v583 = vsub.s32 %v580, %v582
        %v584 = vrot.slane %v170, %v583
        %v586 = vunpack.c.l.s4 1983009808
        %v587 = vunpack.c.0.s8 %v586
        %v588 = vlaneseq
        %v589 = vshrl.u32 %v588, 7
        %v590 = vsub.s32 %v587, %v589
        %v591 = vrot.slane %v577, %v590
        %v592 = vcombine.high %v584, %v584
        %v593 = vcombine.high %v591, %v591
        %v986 = vunpack.c.l.b16 %v171
        %v987 = vunpack.c.h.b16 %v171
        %v988 = vunpack.c.l.b16 %v172
        %v989 = vunpack.c.h.b16 %v172
        %v990 = vunpack.c.l.b16 %v173
        %v991 = vunpack.c.h.b16 %v173
        %v992 = vunpack.c.l.b16 %v174
        %v993 = vunpack.c.h.b16 %v174
        %v994 = vunpack.c.l.b16 %v175
        %v995 = vunpack.c.h.b16 %v175
        %v996 = vunpack.c.l.b16 %v176
        %v997 = vunpack.c.h.b16 %v176
        %v998 = vunpack.c.l.b16 %v177
        %v999 = vunpack.c.h.b16 %v177
        %v1000 = vunpack.c.l.b16 %v178
        %v1001 = vunpack.c.h.b16 %v178
        %v1002 = vunpack.c.l.b16 %v179
        %v1003 = vunpack.c.h.b16 %v179
        %v1004 = vunpack.c.l.b16 %v180
        %v1005 = vunpack.c.h.b16 %v180
        %v1006 = vunpack.c.l.b16 %v181
        %v1007 = vunpack.c.h.b16 %v181
        %v1008 = vunpack.c.l.b16 %v182
        %v1009 = vunpack.c.h.b16 %v182
        %v1010 = vunpack.c.l.b16 %v183
        %v1011 = vunpack.c.h.b16 %v183
        %v1012 = vunpack.c.l.b16 %v184
        %v1013 = vunpack.c.h.b16 %v184
        %v1014 = vunpack.c.l.b16 %v185
        %v1015 = vunpack.c.h.b16 %v185
        %v1016 = vunpack.c.l.b16 %v186
        %v1017 = vunpack.c.h.b16 %v186
        %v1018 = vunpack.c.l.b16 %v187
        %v1019 = vunpack.c.h.b16 %v187
        %v1020 = vunpack.c.l.b16 %v188
        %v1021 = vunpack.c.h.b16 %v188
        %v1022 = vunpack.c.l.b16 %v189
        %v1023 = vunpack.c.h.b16 %v189
        %v1024 = vunpack.c.l.b16 %v190
        %v1025 = vunpack.c.h.b16 %v190
        %v1026 = vunpack.c.l.b16 %v191
        %v1027 = vunpack.c.h.b16 %v191
        %v1028 = vunpack.c.l.b16 %v192
        %v1029 = vunpack.c.h.b16 %v192
        %v1030 = vunpack.c.l.b16 %v193
        %v1031 = vunpack.c.h.b16 %v193
        %v1032 = vunpack.c.l.b16 %v194
        %v1033 = vunpack.c.h.b16 %v194
        %v1034 = vunpack.c.l.b16 %v195
        %v1035 = vunpack.c.h.b16 %v195
        %v1036 = vunpack.c.l.b16 %v196
        %v1037 = vunpack.c.h.b16 %v196
        %v1038 = vunpack.c.l.b16 %v197
        %v1039 = vunpack.c.h.b16 %v197
        %v1040 = vunpack.c.l.b16 %v198
        %v1041 = vunpack.c.h.b16 %v198
        %v1042 = vunpack.c.l.b16 %v199
        %v1043 = vunpack.c.h.b16 %v199
        %v1044 = vunpack.c.l.b16 %v200
        %v1045 = vunpack.c.h.b16 %v200
        %v1046 = vunpack.c.l.b16 %v201
        %v1047 = vunpack.c.h.b16 %v201
        %v1048 = vunpack.c.l.b16 %v202
        %v1049 = vunpack.c.h.b16 %v202
        %v1050 = vunpack.c.l.b16 %v203
        %v1051 = vunpack.c.h.b16 %v203
        %v1052 = vunpack.c.l.b16 %v204
        %v1053 = vunpack.c.h.b16 %v204
        %v1054 = vunpack.c.l.b16 %v205
        %v1055 = vunpack.c.h.b16 %v205
        %v1056 = vunpack.c.l.b16 %v206
        %v1057 = vunpack.c.h.b16 %v206
        %v1058 = vunpack.c.l.b16 %v207
        %v1059 = vunpack.c.h.b16 %v207
        %v1060 = vunpack.c.l.b16 %v208
        %v1061 = vunpack.c.h.b16 %v208
        %v1062 = vunpack.c.l.b16 %v209
        %v1063 = vunpack.c.h.b16 %v209
        %v1064 = vunpack.c.l.b16 %v210
        %v1065 = vunpack.c.h.b16 %v210
        %v1066 = vunpack.c.l.b16 %v211
        %v1067 = vunpack.c.h.b16 %v211
        %v1068 = vunpack.c.l.b16 %v212
        %v1069 = vunpack.c.h.b16 %v212
        %v1070 = vunpack.c.l.b16 %v213
        %v1071 = vunpack.c.h.b16 %v213
        %v1072 = vunpack.c.l.b16 %v214
        %v1073 = vunpack.c.h.b16 %v214
        %v1074 = vunpack.c.l.b16 %v215
        %v1075 = vunpack.c.h.b16 %v215
        %v1076 = vunpack.c.l.b16 %v216
        %v1077 = vunpack.c.h.b16 %v216
        %v1078 = vunpack.c.l.b16 %v217
        %v1079 = vunpack.c.h.b16 %v217
        %v1080 = vunpack.c.l.b16 %v218
        %v1081 = vunpack.c.h.b16 %v218
        %v1082 = vunpack.c.l.b16 %v219
        %v1083 = vunpack.c.h.b16 %v219
        %v1084 = vunpack.c.l.b16 %v220
        %v1085 = vunpack.c.h.b16 %v220
        %v1086 = vunpack.c.l.b16 %v221
        %v1087 = vunpack.c.h.b16 %v221
        %v1088 = vunpack.c.l.b16 %v222
        %v1089 = vunpack.c.h.b16 %v222
        %v1090 = vunpack.c.l.b16 %v223
        %v1091 = vunpack.c.h.b16 %v223
        %v1092 = vunpack.c.l.b16 %v224
        %v1093 = vunpack.c.h.b16 %v224
        %v1094 = vunpack.c.l.b16 %v225
        %v1095 = vunpack.c.h.b16 %v225
        %v1096 = vunpack.c.l.b16 %v226
        %v1097 = vunpack.c.h.b16 %v226
        %v1098 = vunpack.c.l.b16 %v227
        %v1099 = vunpack.c.h.b16 %v227
        %v1100 = vunpack.c.l.b16 %v228
        %v1101 = vunpack.c.h.b16 %v228
        %v1102 = vunpack.c.l.b16 %v229
        %v1103 = vunpack.c.h.b16 %v229
        %v1104 = vunpack.c.l.b16 %v230
        %v1105 = vunpack.c.h.b16 %v230
        %v1106 = vunpack.c.l.b16 %v231
        %v1107 = vunpack.c.h.b16 %v231
        %v1108 = vunpack.c.l.b16 %v232
        %v1109 = vunpack.c.h.b16 %v232
        %v1110 = vunpack.c.l.b16 %v233
        %v1111 = vunpack.c.h.b16 %v233
        %v1112 = vunpack.c.l.b16 %v234
        %v1113 = vunpack.c.h.b16 %v234
        %v1114 = vunpack.c.l.b16 %v235
        %v1115 = vunpack.c.h.b16 %v235
        %v1116 = vunpack.c.l.b16 %v236
        %v1117 = vunpack.c.h.b16 %v236
        %v1118 = vunpack.c.l.b16 %v237
        %v1119 = vunpack.c.h.b16 %v237
        %v1120 = vunpack.c.l.b16 %v238
        %v1121 = vunpack.c.h.b16 %v238
        %v1122 = vunpack.c.l.b16 %v239
        %v1123 = vunpack.c.h.b16 %v239
        %v1124 = vunpack.c.l.b16 %v240
        %v1125 = vunpack.c.h.b16 %v240
        %v1126 = vunpack.c.l.b16 %v241
        %v1127 = vunpack.c.h.b16 %v241
        %v1128 = vunpack.c.l.b16 %v242
        %v1129 = vunpack.c.h.b16 %v242
        %v1130 = vunpack.c.l.b16 %v243
        %v1131 = vunpack.c.h.b16 %v243
        %v1132 = vunpack.c.l.b16 %v244
        %v1133 = vunpack.c.h.b16 %v244
        %v1134 = vunpack.c.l.b16 %v245
        %v1135 = vunpack.c.h.b16 %v245
        %v1136 = vunpack.c.l.b16 %v246
        %v1137 = vunpack.c.h.b16 %v246
        %v1138 = vunpack.c.l.b16 %v247
        %v1139 = vunpack.c.h.b16 %v247
        %v1140 = vunpack.c.l.b16 %v248
        %v1141 = vunpack.c.h.b16 %v248
        %v1142 = vunpack.c.l.b16 %v249
        %v1143 = vunpack.c.h.b16 %v249
        %v1144 = vunpack.c.l.b16 %v250
        %v1145 = vunpack.c.h.b16 %v250
        %v1146 = vunpack.c.l.b16 %v251
        %v1147 = vunpack.c.h.b16 %v251
        %v1148 = vunpack.c.l.b16 %v252
        %v1149 = vunpack.c.h.b16 %v252
        %v1150 = vunpack.c.l.b16 %v253
        %v1151 = vunpack.c.h.b16 %v253
        %v1152 = vunpack.c.l.b16 %v254
        %v1153 = vunpack.c.h.b16 %v254
        %v1154 = vunpack.c.l.b16 %v255
        %v1155 = vunpack.c.h.b16 %v255
        %v1156 = vunpack.c.l.b16 %v256
        %v1157 = vunpack.c.h.b16 %v256
        %v1158 = vunpack.c.l.b16 %v257
        %v1159 = vunpack.c.h.b16 %v257
        %v1160 = vunpack.c.l.b16 %v258
        %v1161 = vunpack.c.h.b16 %v258
        %v1162 = vunpack.c.l.b16 %v259
        %v1163 = vunpack.c.h.b16 %v259
        %v1164 = vunpack.c.l.b16 %v260
        %v1165 = vunpack.c.h.b16 %v260
        %v1166 = vunpack.c.l.b16 %v261
        %v1167 = vunpack.c.h.b16 %v261
        %v1168 = vunpack.c.l.b16 %v262
        %v1169 = vunpack.c.h.b16 %v262
        %v1170 = vunpack.c.l.b16 %v263
        %v1171 = vunpack.c.h.b16 %v263
        %v1172 = vunpack.c.l.b16 %v264
        %v1173 = vunpack.c.h.b16 %v264
        %v1174 = vunpack.c.l.b16 %v265
        %v1175 = vunpack.c.h.b16 %v265
        %v1176 = vunpack.c.l.b16 %v266
        %v1177 = vunpack.c.h.b16 %v266
        %v1178 = vunpack.c.l.b16 %v267
        %v1179 = vunpack.c.h.b16 %v267
        %v1180 = vunpack.c.l.b16 %v268
        %v1181 = vunpack.c.h.b16 %v268
        %v1182 = vunpack.c.l.b16 %v269
        %v1183 = vunpack.c.h.b16 %v269
        %v1184 = vunpack.c.l.b16 %v270
        %v1185 = vunpack.c.h.b16 %v270
        %v1186 = vunpack.c.l.b16 %v271
        %v1187 = vunpack.c.h.b16 %v271
        %v1188 = vunpack.c.l.b16 %v272
        %v1189 = vunpack.c.h.b16 %v272
        %v1190 = vunpack.c.l.b16 %v273
        %v1191 = vunpack.c.h.b16 %v273
        %v1192 = vunpack.c.l.b16 %v274
        %v1193 = vunpack.c.h.b16 %v274
        %v1194 = vunpack.c.l.b16 %v275
        %v1195 = vunpack.c.h.b16 %v275
        %v1196 = vunpack.c.l.b16 %v276
        %v1197 = vunpack.c.h.b16 %v276
        %v1198 = vunpack.c.l.b16 %v277
        %v1199 = vunpack.c.h.b16 %v277
        %v1200 = vunpack.c.l.b16 %v278
        %v1201 = vunpack.c.h.b16 %v278
        %v1202 = vunpack.c.l.b16 %v279
        %v1203 = vunpack.c.h.b16 %v279
        %v1204 = vunpack.c.l.b16 %v280
        %v1205 = vunpack.c.h.b16 %v280
        %v1206 = vunpack.c.l.b16 %v281
        %v1207 = vunpack.c.h.b16 %v281
        %v1208 = vunpack.c.l.b16 %v282
        %v1209 = vunpack.c.h.b16 %v282
        %v1210 = vunpack.c.l.b16 %v283
        %v1211 = vunpack.c.h.b16 %v283
        %v1212 = vunpack.c.l.b16 %v284
        %v1213 = vunpack.c.h.b16 %v284
        %v1214 = vunpack.c.l.b16 %v285
        %v1215 = vunpack.c.h.b16 %v285
        %v1216 = vunpack.c.l.b16 %v286
        %v1217 = vunpack.c.h.b16 %v286
        %v1218 = vunpack.c.l.b16 %v287
        %v1219 = vunpack.c.h.b16 %v287
        %v1220 = vunpack.c.l.b16 %v288
        %v1221 = vunpack.c.h.b16 %v288
        %v1222 = vunpack.c.l.b16 %v289
        %v1223 = vunpack.c.h.b16 %v289
        %v1224 = vunpack.c.l.b16 %v290
        %v1225 = vunpack.c.h.b16 %v290
        %v1226 = vunpack.c.l.b16 %v291
        %v1227 = vunpack.c.h.b16 %v291
        %v1228 = vunpack.c.l.b16 %v292
        %v1229 = vunpack.c.h.b16 %v292
        %v1230 = vunpack.c.l.b16 %v293
        %v1231 = vunpack.c.h.b16 %v293
        %v1232 = vunpack.c.l.b16 %v294
        %v1233 = vunpack.c.h.b16 %v294
        %v1234 = vunpack.c.l.b16 %v295
        %v1235 = vunpack.c.h.b16 %v295
        %v1236 = vunpack.c.l.b16 %v296
        %v1237 = vunpack.c.h.b16 %v296
        %v1238 = vunpack.c.l.b16 %v297
        %v1239 = vunpack.c.h.b16 %v297
        %v1240 = vunpack.c.l.b16 %v298
        %v1241 = vunpack.c.h.b16 %v298
        %v1242 = vunpack.c.l.b16 %v299
        %v1243 = vunpack.c.h.b16 %v299
        %v1244 = vunpack.c.l.b16 %v300
        %v1245 = vunpack.c.h.b16 %v300
        %v1246 = vunpack.c.l.b16 %v301
        %v1247 = vunpack.c.h.b16 %v301
        %v1248 = vunpack.c.l.b16 %v302
        %v1249 = vunpack.c.h.b16 %v302
        %v1250 = vunpack.c.l.b16 %v303
        %v1251 = vunpack.c.h.b16 %v303
        %v1252 = vunpack.c.l.b16 %v304
        %v1253 = vunpack.c.h.b16 %v304
        %v1254 = vunpack.c.l.b16 %v305
        %v1255 = vunpack.c.h.b16 %v305
        %v1256 = vunpack.c.l.b16 %v306
        %v1257 = vunpack.c.h.b16 %v306
        %v1258 = vunpack.c.l.b16 %v307
        %v1259 = vunpack.c.h.b16 %v307
        %v1260 = vunpack.c.l.b16 %v308
        %v1261 = vunpack.c.h.b16 %v308
        %v1262 = vunpack.c.l.b16 %v309
        %v1263 = vunpack.c.h.b16 %v309
        %v1264 = vunpack.c.l.b16 %v310
        %v1265 = vunpack.c.h.b16 %v310
        %v1266 = vunpack.c.l.b16 %v311
        %v1267 = vunpack.c.h.b16 %v311
        %v1268 = vunpack.c.l.b16 %v312
        %v1269 = vunpack.c.h.b16 %v312
        %v1270 = vunpack.c.l.b16 %v313
        %v1271 = vunpack.c.h.b16 %v313
        %v1272 = vunpack.c.l.b16 %v314
        %v1273 = vunpack.c.h.b16 %v314
        %v1274 = vunpack.c.l.b16 %v315
        %v1275 = vunpack.c.h.b16 %v315
        %v1276 = vunpack.c.l.b16 %v316
        %v1277 = vunpack.c.h.b16 %v316
        %v1278 = vunpack.c.l.b16 %v317
        %v1279 = vunpack.c.h.b16 %v317
        %v1280 = vunpack.c.l.b16 %v318
        %v1281 = vunpack.c.h.b16 %v318
        %v1282 = vunpack.c.l.b16 %v319
        %v1283 = vunpack.c.h.b16 %v319
        %v1284 = vunpack.c.l.b16 %v320
        %v1285 = vunpack.c.h.b16 %v320
        %v1286 = vunpack.c.l.b16 %v321
        %v1287 = vunpack.c.h.b16 %v321
        %v1288 = vunpack.c.l.b16 %v322
        %v1289 = vunpack.c.h.b16 %v322
        %v1290 = vunpack.c.l.b16 %v323
        %v1291 = vunpack.c.h.b16 %v323
        %v1292 = vunpack.c.l.b16 %v324
        %v1293 = vunpack.c.h.b16 %v324
        %v1294 = vunpack.c.l.b16 %v325
        %v1295 = vunpack.c.h.b16 %v325
        %v1296 = vunpack.c.l.b16 %v326
        %v1297 = vunpack.c.h.b16 %v326
        %v1298 = vunpack.c.l.b16 %v327
        %v1299 = vunpack.c.h.b16 %v327
        %v1300 = vunpack.c.l.b16 %v328
        %v1301 = vunpack.c.h.b16 %v328
        %v1302 = vunpack.c.l.b16 %v329
        %v1303 = vunpack.c.h.b16 %v329
        %v1304 = vunpack.c.l.b16 %v330
        %v1305 = vunpack.c.h.b16 %v330
        %v1306 = vunpack.c.l.b16 %v331
        %v1307 = vunpack.c.h.b16 %v331
        %v1308 = vunpack.c.l.b16 %v332
        %v1309 = vunpack.c.h.b16 %v332
        %v1310 = vunpack.c.l.b16 %v333
        %v1311 = vunpack.c.h.b16 %v333
        %v1312 = vunpack.c.l.b16 %v334
        %v1313 = vunpack.c.h.b16 %v334
        %v1314 = vunpack.c.l.b16 %v335
        %v1315 = vunpack.c.h.b16 %v335
        %v1316 = vunpack.c.l.b16 %v336
        %v1317 = vunpack.c.h.b16 %v336
        %v1318 = vunpack.c.l.b16 %v337
        %v1319 = vunpack.c.h.b16 %v337
        %v1320 = vunpack.c.l.b16 %v338
        %v1321 = vunpack.c.h.b16 %v338
        %v1322 = vunpack.c.l.b16 %v339
        %v1323 = vunpack.c.h.b16 %v339
        %v1324 = vunpack.c.l.b16 %v340
        %v1325 = vunpack.c.h.b16 %v340
        %v1326 = vunpack.c.l.b16 %v341
        %v1327 = vunpack.c.h.b16 %v341
        %v1328 = vunpack.c.l.b16 %v342
        %v1329 = vunpack.c.h.b16 %v342
        %v1330 = vunpack.c.l.b16 %v343
        %v1331 = vunpack.c.h.b16 %v343
        %v1332 = vunpack.c.l.b16 %v344
        %v1333 = vunpack.c.h.b16 %v344
        %v1334 = vunpack.c.l.b16 %v345
        %v1335 = vunpack.c.h.b16 %v345
        %v1336 = vunpack.c.l.b16 %v346
        %v1337 = vunpack.c.h.b16 %v346
        %v1338 = vunpack.c.l.b16 %v347
        %v1339 = vunpack.c.h.b16 %v347
        %v1340 = vunpack.c.l.b16 %v348
        %v1341 = vunpack.c.h.b16 %v348
        %v1342 = vunpack.c.l.b16 %v349
        %v1343 = vunpack.c.h.b16 %v349
        %v1344 = vunpack.c.l.b16 %v350
        %v1345 = vunpack.c.h.b16 %v350
        %v1346 = vunpack.c.l.b16 %v351
        %v1347 = vunpack.c.h.b16 %v351
        %v1348 = vunpack.c.l.b16 %v352
        %v1349 = vunpack.c.h.b16 %v352
        %v1350 = vunpack.c.l.b16 %v353
        %v1351 = vunpack.c.h.b16 %v353
        %v1352 = vunpack.c.l.b16 %v354
        %v1353 = vunpack.c.h.b16 %v354
        %v1354 = vunpack.c.l.b16 %v355
        %v1355 = vunpack.c.h.b16 %v355
        %v1356 = vunpack.c.l.b16 %v356
        %v1357 = vunpack.c.h.b16 %v356
        %v1358 = vunpack.c.l.b16 %v357
        %v1359 = vunpack.c.h.b16 %v357
        %v1360 = vunpack.c.l.b16 %v358
        %v1361 = vunpack.c.h.b16 %v358
        %v1362 = vunpack.c.l.b16 %v359
        %v1363 = vunpack.c.h.b16 %v359
        %v1364 = vunpack.c.l.b16 %v360
        %v1365 = vunpack.c.h.b16 %v360
        %v1366 = vunpack.c.l.b16 %v361
        %v1367 = vunpack.c.h.b16 %v361
        %v1368 = vunpack.c.l.b16 %v362
        %v1369 = vunpack.c.h.b16 %v362
        %v1370 = vunpack.c.l.b16 %v363
        %v1371 = vunpack.c.h.b16 %v363
        %v1372 = vunpack.c.l.b16 %v364
        %v1373 = vunpack.c.h.b16 %v364
        %v1374 = vunpack.c.l.b16 %v365
        %v1375 = vunpack.c.h.b16 %v365
        %v1376 = vunpack.c.l.b16 %v366
        %v1377 = vunpack.c.h.b16 %v366
        %v1378 = vunpack.c.l.b16 %v367
        %v1379 = vunpack.c.h.b16 %v367
        %v1380 = vunpack.c.l.b16 %v368
        %v1381 = vunpack.c.h.b16 %v368
        %v1382 = vunpack.c.l.b16 %v369
        %v1383 = vunpack.c.h.b16 %v369
        %v1384 = vunpack.c.l.b16 %v370
        %v1385 = vunpack.c.h.b16 %v370
        %v1386 = vunpack.c.l.b16 %v371
        %v1387 = vunpack.c.h.b16 %v371
        %v1388 = vunpack.c.l.b16 %v372
        %v1389 = vunpack.c.h.b16 %v372
        %v1390 = vunpack.c.l.b16 %v373
        %v1391 = vunpack.c.h.b16 %v373
        %v1392 = vunpack.c.l.b16 %v374
        %v1393 = vunpack.c.h.b16 %v374
        %v1394 = vunpack.c.l.b16 %v375
        %v1395 = vunpack.c.h.b16 %v375
        %v1396 = vunpack.c.l.b16 %v376
        %v1397 = vunpack.c.h.b16 %v376
        %v1398 = vunpack.c.l.b16 %v377
        %v1399 = vunpack.c.h.b16 %v377
        %v1400 = vunpack.c.l.b16 %v378
        %v1401 = vunpack.c.h.b16 %v378
        %v1402 = vunpack.c.l.b16 %v379
        %v1403 = vunpack.c.h.b16 %v379
        %v1404 = vunpack.c.l.b16 %v380
        %v1405 = vunpack.c.h.b16 %v380
        %v1406 = vunpack.c.l.b16 %v381
        %v1407 = vunpack.c.h.b16 %v381
        %v1408 = vunpack.c.l.b16 %v382
        %v1409 = vunpack.c.h.b16 %v382
        %v1410 = vunpack.c.l.b16 %v383
        %v1411 = vunpack.c.h.b16 %v383
        %v1412 = vunpack.c.l.b16 %v384
        %v1413 = vunpack.c.h.b16 %v384
        %v1414 = vunpack.c.l.b16 %v385
        %v1415 = vunpack.c.h.b16 %v385
        %v1416 = vunpack.c.l.b16 %v386
        %v1417 = vunpack.c.h.b16 %v386
        %v1418 = vunpack.c.l.b16 %v387
        %v1419 = vunpack.c.h.b16 %v387
        %v1420 = vunpack.c.l.b16 %v388
        %v1421 = vunpack.c.h.b16 %v388
        %v1422 = vunpack.c.l.b16 %v389
        %v1423 = vunpack.c.h.b16 %v389
        %v1424 = vunpack.c.l.b16 %v390
        %v1425 = vunpack.c.h.b16 %v390
        %v1426 = vunpack.c.l.b16 %v391
        %v1427 = vunpack.c.h.b16 %v391
        %v1428 = vunpack.c.l.b16 %v392
        %v1429 = vunpack.c.h.b16 %v392
        %v1430 = vunpack.c.l.b16 %v393
        %v1431 = vunpack.c.h.b16 %v393
        %v1432 = vunpack.c.l.b16 %v394
        %v1433 = vunpack.c.h.b16 %v394
        %v1434 = vunpack.c.l.b16 %v395
        %v1435 = vunpack.c.h.b16 %v395
        %v1436 = vunpack.c.l.b16 %v396
        %v1437 = vunpack.c.h.b16 %v396
        %v1438 = vunpack.c.l.b16 %v397
        %v1439 = vunpack.c.h.b16 %v397
        %v1440 = vunpack.c.l.b16 %v398
        %v1441 = vunpack.c.h.b16 %v398
        %v1442 = vunpack.c.l.b16 %v399
        %v1443 = vunpack.c.h.b16 %v399
        %v1444 = vunpack.c.l.b16 %v400
        %v1445 = vunpack.c.h.b16 %v400
        %v1446 = vunpack.c.l.b16 %v401
        %v1447 = vunpack.c.h.b16 %v401
        %v1448 = vunpack.c.l.b16 %v402
        %v1449 = vunpack.c.h.b16 %v402
        %v1450 = vunpack.c.l.b16 %v403
        %v1451 = vunpack.c.h.b16 %v403
        %v1452 = vunpack.c.l.b16 %v404
        %v1453 = vunpack.c.h.b16 %v404
        %v1454 = vunpack.c.l.b16 %v405
        %v1455 = vunpack.c.h.b16 %v405
        %v1456 = vunpack.c.l.b16 %v406
        %v1457 = vunpack.c.h.b16 %v406
        %v1458 = vunpack.c.l.b16 %v407
        %v1459 = vunpack.c.h.b16 %v407
        %v1460 = vunpack.c.l.b16 %v408
        %v1461 = vunpack.c.h.b16 %v408
        %v1462 = vunpack.c.l.b16 %v409
        %v1463 = vunpack.c.h.b16 %v409
        %v1464 = vunpack.c.l.b16 %v410
        %v1465 = vunpack.c.h.b16 %v410
        %v1466 = vunpack.c.l.b16 %v411
        %v1467 = vunpack.c.h.b16 %v411
        %v1468 = vunpack.c.l.b16 %v412
        %v1469 = vunpack.c.h.b16 %v412
        %v1470 = vunpack.c.l.b16 %v413
        %v1471 = vunpack.c.h.b16 %v413
        %v1472 = vunpack.c.l.b16 %v414
        %v1473 = vunpack.c.h.b16 %v414
        %v1474 = vunpack.c.l.b16 %v415
        %v1475 = vunpack.c.h.b16 %v415
        %v1476 = vunpack.c.l.b16 %v416
        %v1477 = vunpack.c.h.b16 %v416
        %v1478 = vunpack.c.l.b16 %v417
        %v1479 = vunpack.c.h.b16 %v417
        %v1480 = vunpack.c.l.b16 %v418
        %v1481 = vunpack.c.h.b16 %v418
        %v1482 = vunpack.c.l.b16 %v419
        %v1483 = vunpack.c.h.b16 %v419
        %v1484 = vunpack.c.l.b16 %v420
        %v1485 = vunpack.c.h.b16 %v420
        %v1486 = vunpack.c.l.b16 %v421
        %v1487 = vunpack.c.h.b16 %v421
        %v1488 = vunpack.c.l.b16 %v422
        %v1489 = vunpack.c.h.b16 %v422
        %v1490 = vunpack.c.l.b16 %v423
        %v1491 = vunpack.c.h.b16 %v423
        %v1492 = vunpack.c.l.b16 %v424
        %v1493 = vunpack.c.h.b16 %v424
        %v1494 = vunpack.c.l.b16 %v425
        %v1495 = vunpack.c.h.b16 %v425
        %v1496 = vunpack.c.l.b16 %v426
        %v1497 = vunpack.c.h.b16 %v426
        %v1498 = vunpack.c.l.b16 %v427
        %v1499 = vunpack.c.h.b16 %v427
        %v1500 = vunpack.c.l.b16 %v428
        %v1501 = vunpack.c.h.b16 %v428
        %v1502 = vunpack.c.l.b16 %v429
        %v1503 = vunpack.c.h.b16 %v429
        %v1504 = vunpack.c.l.b16 %v430
        %v1505 = vunpack.c.h.b16 %v430
        %v1506 = vunpack.c.l.b16 %v431
        %v1507 = vunpack.c.h.b16 %v431
        %v1508 = vunpack.c.l.b16 %v432
        %v1509 = vunpack.c.h.b16 %v432
        %v1510 = vunpack.c.l.b16 %v433
        %v1511 = vunpack.c.h.b16 %v433
        %v1512 = vunpack.c.l.b16 %v434
        %v1513 = vunpack.c.h.b16 %v434
        %v1514 = vunpack.c.l.b16 %v435
        %v1515 = vunpack.c.h.b16 %v435
        %v1516 = vunpack.c.l.b16 %v436
        %v1517 = vunpack.c.h.b16 %v436
        %v1518 = vunpack.c.l.b16 %v437
        %v1519 = vunpack.c.h.b16 %v437
        %v1520 = vunpack.c.l.b16 %v438
        %v1521 = vunpack.c.h.b16 %v438
        %v1522 = vunpack.c.l.b16 %v439
        %v1523 = vunpack.c.h.b16 %v439
        %v1524 = vunpack.c.l.b16 %v440
        %v1525 = vunpack.c.h.b16 %v440
        %v1526 = vunpack.c.l.b16 %v441
        %v1527 = vunpack.c.h.b16 %v441
        %v1528 = vunpack.c.l.b16 %v442
        %v1529 = vunpack.c.h.b16 %v442
        %v1530 = vunpack.c.l.b16 %v443
        %v1531 = vunpack.c.h.b16 %v443
        %v1532 = vunpack.c.l.b16 %v444
        %v1533 = vunpack.c.h.b16 %v444
        %v1534 = vunpack.c.l.b16 %v445
        %v1535 = vunpack.c.h.b16 %v445
        %v1536 = vunpack.c.l.b16 %v446
        %v1537 = vunpack.c.h.b16 %v446
        %v1538 = vunpack.c.l.b16 %v447
        %v1539 = vunpack.c.h.b16 %v447
        %v1540 = vunpack.c.l.b16 %v448
        %v1541 = vunpack.c.h.b16 %v448
        %v1542 = vunpack.c.l.b16 %v449
        %v1543 = vunpack.c.h.b16 %v449
        %v1544 = vunpack.c.l.b16 %v450
        %v1545 = vunpack.c.h.b16 %v450
        %v1546 = vunpack.c.l.b16 %v451
        %v1547 = vunpack.c.h.b16 %v451
        %v1548 = vunpack.c.l.b16 %v452
        %v1549 = vunpack.c.h.b16 %v452
        %v1550 = vunpack.c.l.b16 %v453
        %v1551 = vunpack.c.h.b16 %v453
        %v1552 = vunpack.c.l.b16 %v454
        %v1553 = vunpack.c.h.b16 %v454
        %v1554 = vunpack.c.l.b16 %v455
        %v1555 = vunpack.c.h.b16 %v455
        %v1556 = vunpack.c.l.b16 %v456
        %v1557 = vunpack.c.h.b16 %v456
        %v1558 = vunpack.c.l.b16 %v457
        %v1559 = vunpack.c.h.b16 %v457
        %v1560 = vunpack.c.l.b16 %v458
        %v1561 = vunpack.c.h.b16 %v458
        %v1562 = vunpack.c.l.b16 %v459
        %v1563 = vunpack.c.h.b16 %v459
        %v1564 = vunpack.c.l.b16 %v460
        %v1565 = vunpack.c.h.b16 %v460
        %v1566 = vunpack.c.l.b16 %v461
        %v1567 = vunpack.c.h.b16 %v461
        %v1568 = vunpack.c.l.b16 %v462
        %v1569 = vunpack.c.h.b16 %v462
        %v1570 = vunpack.c.l.b16 %v463
        %v1571 = vunpack.c.h.b16 %v463
        %v1572 = vunpack.c.l.b16 %v464
        %v1573 = vunpack.c.h.b16 %v464
        %v1574 = vunpack.c.l.b16 %v465
        %v1575 = vunpack.c.h.b16 %v465
        %v1576 = vunpack.c.l.b16 %v466
        %v1577 = vunpack.c.h.b16 %v466
        %v1578 = vunpack.c.l.b16 %v467
        %v1579 = vunpack.c.h.b16 %v467
        %v1580 = vunpack.c.l.b16 %v468
        %v1581 = vunpack.c.h.b16 %v468
        %v1582 = vunpack.c.l.b16 %v469
        %v1583 = vunpack.c.h.b16 %v469
        %v1584 = vunpack.c.l.b16 %v470
        %v1585 = vunpack.c.h.b16 %v470
        %v1586 = vunpack.c.l.b16 %v471
        %v1587 = vunpack.c.h.b16 %v471
        %v1588 = vunpack.c.l.b16 %v472
        %v1589 = vunpack.c.h.b16 %v472
        %v1590 = vunpack.c.l.b16 %v473
        %v1591 = vunpack.c.h.b16 %v473
        %v1592 = vunpack.c.l.b16 %v474
        %v1593 = vunpack.c.h.b16 %v474
        %v1594 = vunpack.c.l.b16 %v475
        %v1595 = vunpack.c.h.b16 %v475
        %v1596 = vunpack.c.l.b16 %v476
        %v1597 = vunpack.c.h.b16 %v476
        %v1598 = vunpack.c.l.b16 %v477
        %v1599 = vunpack.c.h.b16 %v477
        %v1600 = vunpack.c.l.b16 %v478
        %v1601 = vunpack.c.h.b16 %v478
        %v1602 = vunpack.c.l.b16 %v479
        %v1603 = vunpack.c.h.b16 %v479
        %v1604 = vunpack.c.l.b16 %v480
        %v1605 = vunpack.c.h.b16 %v480
        %v1606 = vunpack.c.l.b16 %v481
        %v1607 = vunpack.c.h.b16 %v481
        %v1608 = vunpack.c.l.b16 %v482
        %v1609 = vunpack.c.h.b16 %v482
        %v1610 = vunpack.c.l.b16 %v483
        %v1611 = vunpack.c.h.b16 %v483
        %v1612 = vunpack.c.l.b16 %v484
        %v1613 = vunpack.c.h.b16 %v484
        %v1614 = vunpack.c.l.b16 %v485
        %v1615 = vunpack.c.h.b16 %v485
        %v1616 = vunpack.c.l.b16 %v486
        %v1617 = vunpack.c.h.b16 %v486
        %v1618 = vunpack.c.l.b16 %v487
        %v1619 = vunpack.c.h.b16 %v487
        %v1620 = vunpack.c.l.b16 %v488
        %v1621 = vunpack.c.h.b16 %v488
        %v1622 = vunpack.c.l.b16 %v489
        %v1623 = vunpack.c.h.b16 %v489
        %v1624 = vunpack.c.l.b16 %v490
        %v1625 = vunpack.c.h.b16 %v490
        %v1626 = vunpack.c.l.b16 %v491
        %v1627 = vunpack.c.h.b16 %v491
        %v1628 = vunpack.c.l.b16 %v492
        %v1629 = vunpack.c.h.b16 %v492
        %v1630 = vunpack.c.l.b16 %v493
        %v1631 = vunpack.c.h.b16 %v493
        %v1632 = vunpack.c.l.b16 %v494
        %v1633 = vunpack.c.h.b16 %v494
        %v1634 = vunpack.c.l.b16 %v495
        %v1635 = vunpack.c.h.b16 %v495
        %v1636 = vunpack.c.l.b16 %v496
        %v1637 = vunpack.c.h.b16 %v496
        %v1638 = vunpack.c.l.b16 %v497
        %v1639 = vunpack.c.h.b16 %v497
        %v1640 = vunpack.c.l.b16 %v498
        %v1641 = vunpack.c.h.b16 %v498
        %v1642 = vunpack.c.l.b16 %v499
        %v1643 = vunpack.c.h.b16 %v499
        %v1644 = vunpack.c.l.b16 %v500
        %v1645 = vunpack.c.h.b16 %v500
        %v1646 = vunpack.c.l.b16 %v501
        %v1647 = vunpack.c.h.b16 %v501
        %v1648 = vunpack.c.l.b16 %v502
        %v1649 = vunpack.c.h.b16 %v502
        %v1650 = vunpack.c.l.b16 %v503
        %v1651 = vunpack.c.h.b16 %v503
        %v1652 = vunpack.c.l.b16 %v504
        %v1653 = vunpack.c.h.b16 %v504
        %v1654 = vunpack.c.l.b16 %v505
        %v1655 = vunpack.c.h.b16 %v505
        %v1656 = vunpack.c.l.b16 %v506
        %v1657 = vunpack.c.h.b16 %v506
        %v1658 = vunpack.c.l.b16 %v507
        %v1659 = vunpack.c.h.b16 %v507
        %v1660 = vunpack.c.l.b16 %v508
        %v1661 = vunpack.c.h.b16 %v508
        %v1662 = vunpack.c.l.b16 %v509
        %v1663 = vunpack.c.h.b16 %v509
        %v1664 = vunpack.c.l.b16 %v510
        %v1665 = vunpack.c.h.b16 %v510
        %v1666 = vunpack.c.l.b16 %v511
        %v1667 = vunpack.c.h.b16 %v511
        %v1668 = vunpack.c.l.b16 %v512
        %v1669 = vunpack.c.h.b16 %v512
        %v1670 = vunpack.c.l.b16 %v513
        %v1671 = vunpack.c.h.b16 %v513
        %v1672 = vunpack.c.l.b16 %v514
        %v1673 = vunpack.c.h.b16 %v514
        %v1674 = vunpack.c.l.b16 %v515
        %v1675 = vunpack.c.h.b16 %v515
        %v1676 = vunpack.c.l.b16 %v516
        %v1677 = vunpack.c.h.b16 %v516
        %v1678 = vunpack.c.l.b16 %v517
        %v1679 = vunpack.c.h.b16 %v517
        %v1680 = vunpack.c.l.b16 %v518
        %v1681 = vunpack.c.h.b16 %v518
        %v1682 = vunpack.c.l.b16 %v519
        %v1683 = vunpack.c.h.b16 %v519
        %v1684 = vunpack.c.l.b16 %v520
        %v1685 = vunpack.c.h.b16 %v520
        %v1686 = vunpack.c.l.b16 %v521
        %v1687 = vunpack.c.h.b16 %v521
        %v1688 = vunpack.c.l.b16 %v522
        %v1689 = vunpack.c.h.b16 %v522
        %v1690 = vunpack.c.l.b16 %v523
        %v1691 = vunpack.c.h.b16 %v523
        %v1692 = vunpack.c.l.b16 %v524
        %v1693 = vunpack.c.h.b16 %v524
        %v1694 = vunpack.c.l.b16 %v525
        %v1695 = vunpack.c.h.b16 %v525
        %v1696 = vunpack.c.l.b16 %v526
        %v1697 = vunpack.c.h.b16 %v526
        %v1698 = vunpack.c.l.b16 %v527
        %v1699 = vunpack.c.h.b16 %v527
        %v1700 = vunpack.c.l.b16 %v528
        %v1701 = vunpack.c.h.b16 %v528
        %v1702 = vunpack.c.l.b16 %v529
        %v1703 = vunpack.c.h.b16 %v529
        %v1704 = vunpack.c.l.b16 %v530
        %v1705 = vunpack.c.h.b16 %v530
        %v1706 = vunpack.c.l.b16 %v531
        %v1707 = vunpack.c.h.b16 %v531
        %v1708 = vunpack.c.l.b16 %v532
        %v1709 = vunpack.c.h.b16 %v532
        %v1710 = vunpack.c.l.b16 %v533
        %v1711 = vunpack.c.h.b16 %v533
        %v1712 = vunpack.c.l.b16 %v534
        %v1713 = vunpack.c.h.b16 %v534
        %v1714 = vunpack.c.l.b16 %v535
        %v1715 = vunpack.c.h.b16 %v535
        %v1716 = vunpack.c.l.b16 %v536
        %v1717 = vunpack.c.h.b16 %v536
        %v1718 = vunpack.c.l.b16 %v537
        %v1719 = vunpack.c.h.b16 %v537
        %v1720 = vunpack.c.l.b16 %v538
        %v1721 = vunpack.c.h.b16 %v538
        %v1722 = vunpack.c.l.b16 %v539
        %v1723 = vunpack.c.h.b16 %v539
        %v1724 = vunpack.c.l.b16 %v540
        %v1725 = vunpack.c.h.b16 %v540
        %v1726 = vunpack.c.l.b16 %v541
        %v1727 = vunpack.c.h.b16 %v541
        %v1728 = vunpack.c.l.b16 %v542
        %v1729 = vunpack.c.h.b16 %v542
        %v1730 = vunpack.c.l.b16 %v543
        %v1731 = vunpack.c.h.b16 %v543
        %v1732 = vunpack.c.l.b16 %v544
        %v1733 = vunpack.c.h.b16 %v544
        %v1734 = vunpack.c.l.b16 %v545
        %v1735 = vunpack.c.h.b16 %v545
        %v1736 = vunpack.c.l.b16 %v546
        %v1737 = vunpack.c.h.b16 %v546
        %v1738 = vunpack.c.l.b16 %v547
        %v1739 = vunpack.c.h.b16 %v547
        %v1740 = vunpack.c.l.b16 %v548
        %v1741 = vunpack.c.h.b16 %v548
        %v1742 = vunpack.c.l.b16 %v549
        %v1743 = vunpack.c.h.b16 %v549
        %v1744 = vunpack.c.l.b16 %v550
        %v1745 = vunpack.c.h.b16 %v550
        %v1746 = vunpack.c.l.b16 %v551
        %v1747 = vunpack.c.h.b16 %v551
        %v1748 = vunpack.c.l.b16 %v552
        %v1749 = vunpack.c.h.b16 %v552
        %v1750 = vunpack.c.l.b16 %v553
        %v1751 = vunpack.c.h.b16 %v553
        %v1752 = vunpack.c.l.b16 %v554
        %v1753 = vunpack.c.h.b16 %v554
        %v1754 = vpack.c.b16 %v994, %v986
        %v1755 = vpack.c.b16 %v995, %v987
        %v1756 = vpack.c.b16 %v996, %v988
        %v1757 = vpack.c.b16 %v997, %v989
        %v1758 = vpack.c.b16 %v998, %v990
        %v1759 = vpack.c.b16 %v999, %v991
        %v1760 = vpack.c.b16 %v1000, %v992
        %v1761 = vpack.c.b16 %v1001, %v993
        %v1762 = vpack.c.b16 %v1010, %v1002
        %v1763 = vpack.c.b16 %v1011, %v1003
        %v1764 = vpack.c.b16 %v1012, %v1004
        %v1765 = vpack.c.b16 %v1013, %v1005
        %v1766 = vpack.c.b16 %v1014, %v1006
        %v1767 = vpack.c.b16 %v1015, %v1007
        %v1768 = vpack.c.b16 %v1016, %v1008
        %v1769 = vpack.c.b16 %v1017, %v1009
        %v1770 = vpack.c.b16 %v1026, %v1018
        %v1771 = vpack.c.b16 %v1027, %v1019
        %v1772 = vpack.c.b16 %v1028, %v1020
        %v1773 = vpack.c.b16 %v1029, %v1021
        %v1774 = vpack.c.b16 %v1030, %v1022
        %v1775 = vpack.c.b16 %v1031, %v1023
        %v1776 = vpack.c.b16 %v1032, %v1024
        %v1777 = vpack.c.b16 %v1033, %v1025
        %v1778 = vpack.c.b16 %v1042, %v1034
        %v1779 = vpack.c.b16 %v1043, %v1035
        %v1780 = vpack.c.b16 %v1044, %v1036
        %v1781 = vpack.c.b16 %v1045, %v1037
        %v1782 = vpack.c.b16 %v1046, %v1038
        %v1783 = vpack.c.b16 %v1047, %v1039
        %v1784 = vpack.c.b16 %v1048, %v1040
        %v1785 = vpack.c.b16 %v1049, %v1041
        %v1786 = vpack.c.b16 %v1058, %v1050
        %v1787 = vpack.c.b16 %v1059, %v1051
        %v1788 = vpack.c.b16 %v1060, %v1052
        %v1789 = vpack.c.b16 %v1061, %v1053
        %v1790 = vpack.c.b16 %v1062, %v1054
        %v1791 = vpack.c.b16 %v1063, %v1055
        %v1792 = vpack.c.b16 %v1064, %v1056
        %v1793 = vpack.c.b16 %v1065, %v1057
        %v1794 = vpack.c.b16 %v1074, %v1066
        %v1795 = vpack.c.b16 %v1075, %v1067
        %v1796 = vpack.c.b16 %v1076, %v1068
        %v1797 = vpack.c.b16 %v1077, %v1069
        %v1798 = vpack.c.b16 %v1078, %v1070
        %v1799 = vpack.c.b16 %v1079, %v1071
        %v1800 = vpack.c.b16 %v1080, %v1072
        %v1801 = vpack.c.b16 %v1081, %v1073
        %v1802 = vpack.c.b16 %v1090, %v1082
        %v1803 = vpack.c.b16 %v1091, %v1083
        %v1804 = vpack.c.b16 %v1092, %v1084
        %v1805 = vpack.c.b16 %v1093, %v1085
        %v1806 = vpack.c.b16 %v1094, %v1086
        %v1807 = vpack.c.b16 %v1095, %v1087
        %v1808 = vpack.c.b16 %v1096, %v1088
        %v1809 = vpack.c.b16 %v1097, %v1089
        %v1810 = vpack.c.b16 %v1106, %v1098
        %v1811 = vpack.c.b16 %v1107, %v1099
        %v1812 = vpack.c.b16 %v1108, %v1100
        %v1813 = vpack.c.b16 %v1109, %v1101
        %v1814 = vpack.c.b16 %v1110, %v1102
        %v1815 = vpack.c.b16 %v1111, %v1103
        %v1816 = vpack.c.b16 %v1112, %v1104
        %v1817 = vpack.c.b16 %v1113, %v1105
        %v1818 = vpack.c.b16 %v1122, %v1114
        %v1819 = vpack.c.b16 %v1123, %v1115
        %v1820 = vpack.c.b16 %v1124, %v1116
        %v1821 = vpack.c.b16 %v1125, %v1117
        %v1822 = vpack.c.b16 %v1126, %v1118
        %v1823 = vpack.c.b16 %v1127, %v1119
        %v1824 = vpack.c.b16 %v1128, %v1120
        %v1825 = vpack.c.b16 %v1129, %v1121
        %v1826 = vpack.c.b16 %v1138, %v1130
        %v1827 = vpack.c.b16 %v1139, %v1131
        %v1828 = vpack.c.b16 %v1140, %v1132
        %v1829 = vpack.c.b16 %v1141, %v1133
        %v1830 = vpack.c.b16 %v1142, %v1134
        %v1831 = vpack.c.b16 %v1143, %v1135
        %v1832 = vpack.c.b16 %v1144, %v1136
        %v1833 = vpack.c.b16 %v1145, %v1137
        %v1834 = vpack.c.b16 %v1154, %v1146
        %v1835 = vpack.c.b16 %v1155, %v1147
        %v1836 = vpack.c.b16 %v1156, %v1148
        %v1837 = vpack.c.b16 %v1157, %v1149
        %v1838 = vpack.c.b16 %v1158, %v1150
        %v1839 = vpack.c.b16 %v1159, %v1151
        %v1840 = vpack.c.b16 %v1160, %v1152
        %v1841 = vpack.c.b16 %v1161, %v1153
        %v1842 = vpack.c.b16 %v1170, %v1162
        %v1843 = vpack.c.b16 %v1171, %v1163
        %v1844 = vpack.c.b16 %v1172, %v1164
        %v1845 = vpack.c.b16 %v1173, %v1165
        %v1846 = vpack.c.b16 %v1174, %v1166
        %v1847 = vpack.c.b16 %v1175, %v1167
        %v1848 = vpack.c.b16 %v1176, %v1168
        %v1849 = vpack.c.b16 %v1177, %v1169
        %v1850 = vpack.c.b16 %v1186, %v1178
        %v1851 = vpack.c.b16 %v1187, %v1179
        %v1852 = vpack.c.b16 %v1188, %v1180
        %v1853 = vpack.c.b16 %v1189, %v1181
        %v1854 = vpack.c.b16 %v1190, %v1182
        %v1855 = vpack.c.b16 %v1191, %v1183
        %v1856 = vpack.c.b16 %v1192, %v1184
        %v1857 = vpack.c.b16 %v1193, %v1185
        %v1858 = vpack.c.b16 %v1202, %v1194
        %v1859 = vpack.c.b16 %v1203, %v1195
        %v1860 = vpack.c.b16 %v1204, %v1196
        %v1861 = vpack.c.b16 %v1205, %v1197
        %v1862 = vpack.c.b16 %v1206, %v1198
        %v1863 = vpack.c.b16 %v1207, %v1199
        %v1864 = vpack.c.b16 %v1208, %v1200
        %v1865 = vpack.c.b16 %v1209, %v1201
        %v1866 = vpack.c.b16 %v1218, %v1210
        %v1867 = vpack.c.b16 %v1219, %v1211
        %v1868 = vpack.c.b16 %v1220, %v1212
        %v1869 = vpack.c.b16 %v1221, %v1213
        %v1870 = vpack.c.b16 %v1222, %v1214
        %v1871 = vpack.c.b16 %v1223, %v1215
        %v1872 = vpack.c.b16 %v1224, %v1216
        %v1873 = vpack.c.b16 %v1225, %v1217
        %v1874 = vpack.c.b16 %v1234, %v1226
        %v1875 = vpack.c.b16 %v1235, %v1227
        %v1876 = vpack.c.b16 %v1236, %v1228
        %v1877 = vpack.c.b16 %v1237, %v1229
        %v1878 = vpack.c.b16 %v1238, %v1230
        %v1879 = vpack.c.b16 %v1239, %v1231
        %v1880 = vpack.c.b16 %v1240, %v1232
        %v1881 = vpack.c.b16 %v1241, %v1233
        %v1882 = vpack.c.b16 %v1250, %v1242
        %v1883 = vpack.c.b16 %v1251, %v1243
        %v1884 = vpack.c.b16 %v1252, %v1244
        %v1885 = vpack.c.b16 %v1253, %v1245
        %v1886 = vpack.c.b16 %v1254, %v1246
        %v1887 = vpack.c.b16 %v1255, %v1247
        %v1888 = vpack.c.b16 %v1256, %v1248
        %v1889 = vpack.c.b16 %v1257, %v1249
        %v1890 = vpack.c.b16 %v1266, %v1258
        %v1891 = vpack.c.b16 %v1267, %v1259
        %v1892 = vpack.c.b16 %v1268, %v1260
        %v1893 = vpack.c.b16 %v1269, %v1261
        %v1894 = vpack.c.b16 %v1270, %v1262
        %v1895 = vpack.c.b16 %v1271, %v1263
        %v1896 = vpack.c.b16 %v1272, %v1264
        %v1897 = vpack.c.b16 %v1273, %v1265
        %v1898 = vpack.c.b16 %v1282, %v1274
        %v1899 = vpack.c.b16 %v1283, %v1275
        %v1900 = vpack.c.b16 %v1284, %v1276
        %v1901 = vpack.c.b16 %v1285, %v1277
        %v1902 = vpack.c.b16 %v1286, %v1278
        %v1903 = vpack.c.b16 %v1287, %v1279
        %v1904 = vpack.c.b16 %v1288, %v1280
        %v1905 = vpack.c.b16 %v1289, %v1281
        %v1906 = vpack.c.b16 %v1298, %v1290
        %v1907 = vpack.c.b16 %v1299, %v1291
        %v1908 = vpack.c.b16 %v1300, %v1292
        %v1909 = vpack.c.b16 %v1301, %v1293
        %v1910 = vpack.c.b16 %v1302, %v1294
        %v1911 = vpack.c.b16 %v1303, %v1295
        %v1912 = vpack.c.b16 %v1304, %v1296
        %v1913 = vpack.c.b16 %v1305, %v1297
        %v1914 = vpack.c.b16 %v1314, %v1306
        %v1915 = vpack.c.b16 %v1315, %v1307
        %v1916 = vpack.c.b16 %v1316, %v1308
        %v1917 = vpack.c.b16 %v1317, %v1309
        %v1918 = vpack.c.b16 %v1318, %v1310
        %v1919 = vpack.c.b16 %v1319, %v1311
        %v1920 = vpack.c.b16 %v1320, %v1312
        %v1921 = vpack.c.b16 %v1321, %v1313
        %v1922 = vpack.c.b16 %v1330, %v1322
        %v1923 = vpack.c.b16 %v1331, %v1323
        %v1924 = vpack.c.b16 %v1332, %v1324
        %v1925 = vpack.c.b16 %v1333, %v1325
        %v1926 = vpack.c.b16 %v1334, %v1326
        %v1927 = vpack.c.b16 %v1335, %v1327
        %v1928 = vpack.c.b16 %v1336, %v1328
        %v1929 = vpack.c.b16 %v1337, %v1329
        %v1930 = vpack.c.b16 %v1346, %v1338
        %v1931 = vpack.c.b16 %v1347, %v1339
        %v1932 = vpack.c.b16 %v1348, %v1340
        %v1933 = vpack.c.b16 %v1349, %v1341
        %v1934 = vpack.c.b16 %v1350, %v1342
        %v1935 = vpack.c.b16 %v1351, %v1343
        %v1936 = vpack.c.b16 %v1352, %v1344
        %v1937 = vpack.c.b16 %v1353, %v1345
        %v1938 = vpack.c.b16 %v1362, %v1354
        %v1939 = vpack.c.b16 %v1363, %v1355
        %v1940 = vpack.c.b16 %v1364, %v1356
        %v1941 = vpack.c.b16 %v1365, %v1357
        %v1942 = vpack.c.b16 %v1366, %v1358
        %v1943 = vpack.c.b16 %v1367, %v1359
        %v1944 = vpack.c.b16 %v1368, %v1360
        %v1945 = vpack.c.b16 %v1369, %v1361
        %v1946 = vpack.c.b16 %v1378, %v1370
        %v1947 = vpack.c.b16 %v1379, %v1371
        %v1948 = vpack.c.b16 %v1380, %v1372
        %v1949 = vpack.c.b16 %v1381, %v1373
        %v1950 = vpack.c.b16 %v1382, %v1374
        %v1951 = vpack.c.b16 %v1383, %v1375
        %v1952 = vpack.c.b16 %v1384, %v1376
        %v1953 = vpack.c.b16 %v1385, %v1377
        %v1954 = vpack.c.b16 %v1394, %v1386
        %v1955 = vpack.c.b16 %v1395, %v1387
        %v1956 = vpack.c.b16 %v1396, %v1388
        %v1957 = vpack.c.b16 %v1397, %v1389
        %v1958 = vpack.c.b16 %v1398, %v1390
        %v1959 = vpack.c.b16 %v1399, %v1391
        %v1960 = vpack.c.b16 %v1400, %v1392
        %v1961 = vpack.c.b16 %v1401, %v1393
        %v1962 = vpack.c.b16 %v1410, %v1402
        %v1963 = vpack.c.b16 %v1411, %v1403
        %v1964 = vpack.c.b16 %v1412, %v1404
        %v1965 = vpack.c.b16 %v1413, %v1405
        %v1966 = vpack.c.b16 %v1414, %v1406
        %v1967 = vpack.c.b16 %v1415, %v1407
        %v1968 = vpack.c.b16 %v1416, %v1408
        %v1969 = vpack.c.b16 %v1417, %v1409
        %v1970 = vpack.c.b16 %v1426, %v1418
        %v1971 = vpack.c.b16 %v1427, %v1419
        %v1972 = vpack.c.b16 %v1428, %v1420
        %v1973 = vpack.c.b16 %v1429, %v1421
        %v1974 = vpack.c.b16 %v1430, %v1422
        %v1975 = vpack.c.b16 %v1431, %v1423
        %v1976 = vpack.c.b16 %v1432, %v1424
        %v1977 = vpack.c.b16 %v1433, %v1425
        %v1978 = vpack.c.b16 %v1442, %v1434
        %v1979 = vpack.c.b16 %v1443, %v1435
        %v1980 = vpack.c.b16 %v1444, %v1436
        %v1981 = vpack.c.b16 %v1445, %v1437
        %v1982 = vpack.c.b16 %v1446, %v1438
        %v1983 = vpack.c.b16 %v1447, %v1439
        %v1984 = vpack.c.b16 %v1448, %v1440
        %v1985 = vpack.c.b16 %v1449, %v1441
        %v1986 = vpack.c.b16 %v1458, %v1450
        %v1987 = vpack.c.b16 %v1459, %v1451
        %v1988 = vpack.c.b16 %v1460, %v1452
        %v1989 = vpack.c.b16 %v1461, %v1453
        %v1990 = vpack.c.b16 %v1462, %v1454
        %v1991 = vpack.c.b16 %v1463, %v1455
        %v1992 = vpack.c.b16 %v1464, %v1456
        %v1993 = vpack.c.b16 %v1465, %v1457
        %v1994 = vpack.c.b16 %v1474, %v1466
        %v1995 = vpack.c.b16 %v1475, %v1467
        %v1996 = vpack.c.b16 %v1476, %v1468
        %v1997 = vpack.c.b16 %v1477, %v1469
        %v1998 = vpack.c.b16 %v1478, %v1470
        %v1999 = vpack.c.b16 %v1479, %v1471
        %v2000 = vpack.c.b16 %v1480, %v1472
        %v2001 = vpack.c.b16 %v1481, %v1473
        %v2002 = vpack.c.b16 %v1490, %v1482
        %v2003 = vpack.c.b16 %v1491, %v1483
        %v2004 = vpack.c.b16 %v1492, %v1484
        %v2005 = vpack.c.b16 %v1493, %v1485
        %v2006 = vpack.c.b16 %v1494, %v1486
        %v2007 = vpack.c.b16 %v1495, %v1487
        %v2008 = vpack.c.b16 %v1496, %v1488
        %v2009 = vpack.c.b16 %v1497, %v1489
        %v2010 = vpack.c.b16 %v1506, %v1498
        %v2011 = vpack.c.b16 %v1507, %v1499
        %v2012 = vpack.c.b16 %v1508, %v1500
        %v2013 = vpack.c.b16 %v1509, %v1501
        %v2014 = vpack.c.b16 %v1510, %v1502
        %v2015 = vpack.c.b16 %v1511, %v1503
        %v2016 = vpack.c.b16 %v1512, %v1504
        %v2017 = vpack.c.b16 %v1513, %v1505
        %v2018 = vpack.c.b16 %v1522, %v1514
        %v2019 = vpack.c.b16 %v1523, %v1515
        %v2020 = vpack.c.b16 %v1524, %v1516
        %v2021 = vpack.c.b16 %v1525, %v1517
        %v2022 = vpack.c.b16 %v1526, %v1518
        %v2023 = vpack.c.b16 %v1527, %v1519
        %v2024 = vpack.c.b16 %v1528, %v1520
        %v2025 = vpack.c.b16 %v1529, %v1521
        %v2026 = vpack.c.b16 %v1538, %v1530
        %v2027 = vpack.c.b16 %v1539, %v1531
        %v2028 = vpack.c.b16 %v1540, %v1532
        %v2029 = vpack.c.b16 %v1541, %v1533
        %v2030 = vpack.c.b16 %v1542, %v1534
        %v2031 = vpack.c.b16 %v1543, %v1535
        %v2032 = vpack.c.b16 %v1544, %v1536
        %v2033 = vpack.c.b16 %v1545, %v1537
        %v2034 = vpack.c.b16 %v1554, %v1546
        %v2035 = vpack.c.b16 %v1555, %v1547
        %v2036 = vpack.c.b16 %v1556, %v1548
        %v2037 = vpack.c.b16 %v1557, %v1549
        %v2038 = vpack.c.b16 %v1558, %v1550
        %v2039 = vpack.c.b16 %v1559, %v1551
        %v2040 = vpack.c.b16 %v1560, %v1552
        %v2041 = vpack.c.b16 %v1561, %v1553
        %v2042 = vpack.c.b16 %v1570, %v1562
        %v2043 = vpack.c.b16 %v1571, %v1563
        %v2044 = vpack.c.b16 %v1572, %v1564
        %v2045 = vpack.c.b16 %v1573, %v1565
        %v2046 = vpack.c.b16 %v1574, %v1566
        %v2047 = vpack.c.b16 %v1575, %v1567
        %v2048 = vpack.c.b16 %v1576, %v1568
        %v2049 = vpack.c.b16 %v1577, %v1569
        %v2050 = vpack.c.b16 %v1586, %v1578
        %v2051 = vpack.c.b16 %v1587, %v1579
        %v2052 = vpack.c.b16 %v1588, %v1580
        %v2053 = vpack.c.b16 %v1589, %v1581
        %v2054 = vpack.c.b16 %v1590, %v1582
        %v2055 = vpack.c.b16 %v1591, %v1583
        %v2056 = vpack.c.b16 %v1592, %v1584
        %v2057 = vpack.c.b16 %v1593, %v1585
        %v2058 = vpack.c.b16 %v1602, %v1594
        %v2059 = vpack.c.b16 %v1603, %v1595
        %v2060 = vpack.c.b16 %v1604, %v1596
        %v2061 = vpack.c.b16 %v1605, %v1597
        %v2062 = vpack.c.b16 %v1606, %v1598
        %v2063 = vpack.c.b16 %v1607, %v1599
        %v2064 = vpack.c.b16 %v1608, %v1600
        %v2065 = vpack.c.b16 %v1609, %v1601
        %v2066 = vpack.c.b16 %v1618, %v1610
        %v2067 = vpack.c.b16 %v1619, %v1611
        %v2068 = vpack.c.b16 %v1620, %v1612
        %v2069 = vpack.c.b16 %v1621, %v1613
        %v2070 = vpack.c.b16 %v1622, %v1614
        %v2071 = vpack.c.b16 %v1623, %v1615
        %v2072 = vpack.c.b16 %v1624, %v1616
        %v2073 = vpack.c.b16 %v1625, %v1617
        %v2074 = vpack.c.b16 %v1634, %v1626
        %v2075 = vpack.c.b16 %v1635, %v1627
        %v2076 = vpack.c.b16 %v1636, %v1628
        %v2077 = vpack.c.b16 %v1637, %v1629
        %v2078 = vpack.c.b16 %v1638, %v1630
        %v2079 = vpack.c.b16 %v1639, %v1631
        %v2080 = vpack.c.b16 %v1640, %v1632
        %v2081 = vpack.c.b16 %v1641, %v1633
        %v2082 = vpack.c.b16 %v1650, %v1642
        %v2083 = vpack.c.b16 %v1651, %v1643
        %v2084 = vpack.c.b16 %v1652, %v1644
        %v2085 = vpack.c.b16 %v1653, %v1645
        %v2086 = vpack.c.b16 %v1654, %v1646
        %v2087 = vpack.c.b16 %v1655, %v1647
        %v2088 = vpack.c.b16 %v1656, %v1648
        %v2089 = vpack.c.b16 %v1657, %v1649
        %v2090 = vpack.c.b16 %v1666, %v1658
        %v2091 = vpack.c.b16 %v1667, %v1659
        %v2092 = vpack.c.b16 %v1668, %v1660
        %v2093 = vpack.c.b16 %v1669, %v1661
        %v2094 = vpack.c.b16 %v1670, %v1662
        %v2095 = vpack.c.b16 %v1671, %v1663
        %v2096 = vpack.c.b16 %v1672, %v1664
        %v2097 = vpack.c.b16 %v1673, %v1665
        %v2098 = vpack.c.b16 %v1682, %v1674
        %v2099 = vpack.c.b16 %v1683, %v1675
        %v2100 = vpack.c.b16 %v1684, %v1676
        %v2101 = vpack.c.b16 %v1685, %v1677
        %v2102 = vpack.c.b16 %v1686, %v1678
        %v2103 = vpack.c.b16 %v1687, %v1679
        %v2104 = vpack.c.b16 %v1688, %v1680
        %v2105 = vpack.c.b16 %v1689, %v1681
        %v2106 = vpack.c.b16 %v1698, %v1690
        %v2107 = vpack.c.b16 %v1699, %v1691
        %v2108 = vpack.c.b16 %v1700, %v1692
        %v2109 = vpack.c.b16 %v1701, %v1693
        %v2110 = vpack.c.b16 %v1702, %v1694
        %v2111 = vpack.c.b16 %v1703, %v1695
        %v2112 = vpack.c.b16 %v1704, %v1696
        %v2113 = vpack.c.b16 %v1705, %v1697
        %v2114 = vpack.c.b16 %v1714, %v1706
        %v2115 = vpack.c.b16 %v1715, %v1707
        %v2116 = vpack.c.b16 %v1716, %v1708
        %v2117 = vpack.c.b16 %v1717, %v1709
        %v2118 = vpack.c.b16 %v1718, %v1710
        %v2119 = vpack.c.b16 %v1719, %v1711
        %v2120 = vpack.c.b16 %v1720, %v1712
        %v2121 = vpack.c.b16 %v1721, %v1713
        %v2122 = vpack.c.b16 %v1730, %v1722
        %v2123 = vpack.c.b16 %v1731, %v1723
        %v2124 = vpack.c.b16 %v1732, %v1724
        %v2125 = vpack.c.b16 %v1733, %v1725
        %v2126 = vpack.c.b16 %v1734, %v1726
        %v2127 = vpack.c.b16 %v1735, %v1727
        %v2128 = vpack.c.b16 %v1736, %v1728
        %v2129 = vpack.c.b16 %v1737, %v1729
        %v2130 = vpack.c.b16 %v1746, %v1738
        %v2131 = vpack.c.b16 %v1747, %v1739
        %v2132 = vpack.c.b16 %v1748, %v1740
        %v2133 = vpack.c.b16 %v1749, %v1741
        %v2134 = vpack.c.b16 %v1750, %v1742
        %v2135 = vpack.c.b16 %v1751, %v1743
        %v2136 = vpack.c.b16 %v1752, %v1744
        %v2137 = vpack.c.b16 %v1753, %v1745
        %v2525 = vcombine.high %v555, %v555
        %v2526 = vcombine.high %v556, %v556
        %v2527 = vcombine.high %v557, %v557
        %2531 = vmatprep.subr.bf16.mxu0 %v1755
        %2532 = vmatpush1.bf16.xpose.msra.mxu0 %v1754
        %2533 = vmatprep.subr.bf16.mxu0 %v1763
        %2534 = vmatpush1.bf16.xpose.msra.mxu0 %v1762
        %2535 = vmatprep.subr.bf16.mxu0 %v1771
        %2536 = vmatpush1.bf16.xpose.msra.mxu0 %v1770
        %2537 = vmatprep.subr.bf16.mxu0 %v1779
        %2538 = vmatpush1.bf16.xpose.msra.mxu0 %v1778
        %2539 = vmatprep.subr.bf16.mxu0 %v1787
        %2540 = vmatpush1.bf16.xpose.msra.mxu0 %v1786
        %2541 = vmatprep.subr.bf16.mxu0 %v1795
        %2542 = vmatpush1.bf16.xpose.msra.mxu0 %v1794
        %2543 = vmatprep.subr.bf16.mxu0 %v1803
        %2544 = vmatpush1.bf16.xpose.msra.mxu0 %v1802
        %2545 = vmatprep.subr.bf16.mxu0 %v1811
        %2546 = vmatpush1.bf16.xpose.msra.mxu0 %v1810
        %2547 = vmatprep.subr.bf16.mxu0 %v1819
        %2548 = vmatpush1.bf16.xpose.msra.mxu0 %v1818
        %2549 = vmatprep.subr.bf16.mxu0 %v1827
        %2550 = vmatpush1.bf16.xpose.msra.mxu0 %v1826
        %2551 = vmatprep.subr.bf16.mxu0 %v1835
        %2552 = vmatpush1.bf16.xpose.msra.mxu0 %v1834
        %2553 = vmatprep.subr.bf16.mxu0 %v1843
        %2554 = vmatpush1.bf16.xpose.msra.mxu0 %v1842
        %2555 = vmatprep.subr.bf16.mxu0 %v1851
        %2556 = vmatpush1.bf16.xpose.msra.mxu0 %v1850
        %2557 = vmatprep.subr.bf16.mxu0 %v1859
        %2558 = vmatpush1.bf16.xpose.msra.mxu0 %v1858
        %2559 = vmatprep.subr.bf16.mxu0 %v1867
        %2560 = vmatpush1.bf16.xpose.msra.mxu0 %v1866
        %2561 = vmatprep.subr.bf16.mxu0 %v1875
        %2562 = vmatpush1.bf16.xpose.msra.mxu0 %v1874
        %2563 = vmatprep.mubr.bf16.mxu0 %v575
        %2564 = vmatmul.mubr.bf16.gmra.mrb[0].mxu0 %v567
        %v2565 = vpop.f32.mrb[0].mxu0
        %v2566 = vadd.f32 %v555, %v2565
        %v2567 = vpop.f32.mrb[0].mxu0
        %v2568 = vadd.f32 %v2525, %v2567
        %v2569 = vpop.f32.mrb[0].mxu0
        %v2570 = vpop.f32.mrb[0].mxu0
        %2571 = vdwg.mxu0
        %2572 = vmatprep.subr.bf16.mxu0 %v1757
        %2573 = vmatpush1.bf16.xpose.msra.mxu0 %v1756
        %2574 = vmatprep.subr.bf16.mxu0 %v1765
        %2575 = vmatpush1.bf16.xpose.msra.mxu0 %v1764
        %2576 = vmatprep.subr.bf16.mxu0 %v1773
        %2577 = vmatpush1.bf16.xpose.msra.mxu0 %v1772
        %2578 = vmatprep.subr.bf16.mxu0 %v1781
        %2579 = vmatpush1.bf16.xpose.msra.mxu0 %v1780
        %2580 = vmatprep.subr.bf16.mxu0 %v1789
        %2581 = vmatpush1.bf16.xpose.msra.mxu0 %v1788
        %2582 = vmatprep.subr.bf16.mxu0 %v1797
        %2583 = vmatpush1.bf16.xpose.msra.mxu0 %v1796
        %2584 = vmatprep.subr.bf16.mxu0 %v1805
        %2585 = vmatpush1.bf16.xpose.msra.mxu0 %v1804
        %2586 = vmatprep.subr.bf16.mxu0 %v1813
        %2587 = vmatpush1.bf16.xpose.msra.mxu0 %v1812
        %2588 = vmatprep.subr.bf16.mxu0 %v1821
        %2589 = vmatpush1.bf16.xpose.msra.mxu0 %v1820
        %2590 = vmatprep.subr.bf16.mxu0 %v1829
        %2591 = vmatpush1.bf16.xpose.msra.mxu0 %v1828
        %2592 = vmatprep.subr.bf16.mxu0 %v1837
        %2593 = vmatpush1.bf16.xpose.msra.mxu0 %v1836
        %2594 = vmatprep.subr.bf16.mxu0 %v1845
        %2595 = vmatpush1.bf16.xpose.msra.mxu0 %v1844
        %2596 = vmatprep.subr.bf16.mxu0 %v1853
        %2597 = vmatpush1.bf16.xpose.msra.mxu0 %v1852
        %2598 = vmatprep.subr.bf16.mxu0 %v1861
        %2599 = vmatpush1.bf16.xpose.msra.mxu0 %v1860
        %2600 = vmatprep.subr.bf16.mxu0 %v1869
        %2601 = vmatpush1.bf16.xpose.msra.mxu0 %v1868
        %2602 = vmatprep.subr.bf16.mxu0 %v1877
        %2603 = vmatpush1.bf16.xpose.msra.mxu0 %v1876
        %2604 = vmatprep.mubr.bf16.mxu0 %v576
        %2605 = vmatmul.mubr.bf16.gmra.mrb[0].mxu0 %v574
        %v2606 = vpop.f32.mrb[0].mxu0
        %v2607 = vadd.f32 %v2566, %v2606
        %v2608 = vpop.f32.mrb[0].mxu0
        %v2609 = vadd.f32 %v2568, %v2608
        %v2610 = vpop.f32.mrb[0].mxu0
        %v2611 = vpop.f32.mrb[0].mxu0
        %2612 = vdwg.mxu0
        %2613 = vmatprep.subr.bf16.mxu0 %v1759
        %2614 = vmatpush1.bf16.xpose.msra.mxu0 %v1758
        %2615 = vmatprep.subr.bf16.mxu0 %v1767
        %2616 = vmatpush1.bf16.xpose.msra.mxu0 %v1766
        %2617 = vmatprep.subr.bf16.mxu0 %v1775
        %2618 = vmatpush1.bf16.xpose.msra.mxu0 %v1774
        %2619 = vmatprep.subr.bf16.mxu0 %v1783
        %2620 = vmatpush1.bf16.xpose.msra.mxu0 %v1782
        %2621 = vmatprep.subr.bf16.mxu0 %v1791
        %2622 = vmatpush1.bf16.xpose.msra.mxu0 %v1790
        %2623 = vmatprep.subr.bf16.mxu0 %v1799
        %2624 = vmatpush1.bf16.xpose.msra.mxu0 %v1798
        %2625 = vmatprep.subr.bf16.mxu0 %v1807
        %2626 = vmatpush1.bf16.xpose.msra.mxu0 %v1806
        %2627 = vmatprep.subr.bf16.mxu0 %v1815
        %2628 = vmatpush1.bf16.xpose.msra.mxu0 %v1814
        %2629 = vmatprep.subr.bf16.mxu0 %v1823
        %2630 = vmatpush1.bf16.xpose.msra.mxu0 %v1822
        %2631 = vmatprep.subr.bf16.mxu0 %v1831
        %2632 = vmatpush1.bf16.xpose.msra.mxu0 %v1830
        %2633 = vmatprep.subr.bf16.mxu0 %v1839
        %2634 = vmatpush1.bf16.xpose.msra.mxu0 %v1838
        %2635 = vmatprep.subr.bf16.mxu0 %v1847
        %2636 = vmatpush1.bf16.xpose.msra.mxu0 %v1846
        %2637 = vmatprep.subr.bf16.mxu0 %v1855
        %2638 = vmatpush1.bf16.xpose.msra.mxu0 %v1854
        %2639 = vmatprep.subr.bf16.mxu0 %v1863
        %2640 = vmatpush1.bf16.xpose.msra.mxu0 %v1862
        %2641 = vmatprep.subr.bf16.mxu0 %v1871
        %2642 = vmatpush1.bf16.xpose.msra.mxu0 %v1870
        %2643 = vmatprep.subr.bf16.mxu0 %v1879
        %2644 = vmatpush1.bf16.xpose.msra.mxu0 %v1878
        %2645 = vmatprep.mubr.bf16.mxu0 %v592
        %2646 = vmatmul.mubr.bf16.gmra.mrb[0].mxu0 %v584
        %v2647 = vpop.f32.mrb[0].mxu0
        %v2648 = vadd.f32 %v2607, %v2647
        %v2649 = vpop.f32.mrb[0].mxu0
        %v2650 = vadd.f32 %v2609, %v2649
        %v2651 = vpop.f32.mrb[0].mxu0
        %v2652 = vpop.f32.mrb[0].mxu0
        %2653 = vdwg.mxu0
        %2654 = vmatprep.subr.bf16.mxu0 %v1761
        %2655 = vmatpush1.bf16.xpose.msra.mxu0 %v1760
        %2656 = vmatprep.subr.bf16.mxu0 %v1769
        %2657 = vmatpush1.bf16.xpose.msra.mxu0 %v1768
        %2658 = vmatprep.subr.bf16.mxu0 %v1777
        %2659 = vmatpush1.bf16.xpose.msra.mxu0 %v1776
        %2660 = vmatprep.subr.bf16.mxu0 %v1785
        %2661 = vmatpush1.bf16.xpose.msra.mxu0 %v1784
        %2662 = vmatprep.subr.bf16.mxu0 %v1793
        %2663 = vmatpush1.bf16.xpose.msra.mxu0 %v1792
        %2664 = vmatprep.subr.bf16.mxu0 %v1801
        %2665 = vmatpush1.bf16.xpose.msra.mxu0 %v1800
        %2666 = vmatprep.subr.bf16.mxu0 %v1809
        %2667 = vmatpush1.bf16.xpose.msra.mxu0 %v1808
        %2668 = vmatprep.subr.bf16.mxu0 %v1817
        %2669 = vmatpush1.bf16.xpose.msra.mxu0 %v1816
        %2670 = vmatprep.subr.bf16.mxu0 %v1825
        %2671 = vmatpush1.bf16.xpose.msra.mxu0 %v1824
        %2672 = vmatprep.subr.bf16.mxu0 %v1833
        %2673 = vmatpush1.bf16.xpose.msra.mxu0 %v1832
        %2674 = vmatprep.subr.bf16.mxu0 %v1841
        %2675 = vmatpush1.bf16.xpose.msra.mxu0 %v1840
        %2676 = vmatprep.subr.bf16.mxu0 %v1849
        %2677 = vmatpush1.bf16.xpose.msra.mxu0 %v1848
        %2678 = vmatprep.subr.bf16.mxu0 %v1857
        %2679 = vmatpush1.bf16.xpose.msra.mxu0 %v1856
        %2680 = vmatprep.subr.bf16.mxu0 %v1865
        %2681 = vmatpush1.bf16.xpose.msra.mxu0 %v1864
        %2682 = vmatprep.subr.bf16.mxu0 %v1873
        %2683 = vmatpush1.bf16.xpose.msra.mxu0 %v1872
        %2684 = vmatprep.subr.bf16.mxu0 %v1881
        %2685 = vmatpush1.bf16.xpose.msra.mxu0 %v1880
        %2686 = vmatprep.mubr.bf16.mxu0 %v593
        %2687 = vmatmul.mubr.bf16.gmra.mrb[0].mxu0 %v591
        %v2688 = vpop.f32.mrb[0].mxu0
        %v2689 = vadd.f32 %v2648, %v2688
        %v2690 = vpop.f32.mrb[0].mxu0
        %v2691 = vadd.f32 %v2650, %v2690
        %v2692 = vpop.f32.mrb[0].mxu0
        %v2693 = vpop.f32.mrb[0].mxu0
        %2694 = vdwg.mxu0
        %2695 = vmatprep.subr.bf16.mxu0 %v1883
        %2696 = vmatpush1.bf16.xpose.msra.mxu0 %v1882
        %2697 = vmatprep.subr.bf16.mxu0 %v1891
        %2698 = vmatpush1.bf16.xpose.msra.mxu0 %v1890
        %2699 = vmatprep.subr.bf16.mxu0 %v1899
        %2700 = vmatpush1.bf16.xpose.msra.mxu0 %v1898
        %2701 = vmatprep.subr.bf16.mxu0 %v1907
        %2702 = vmatpush1.bf16.xpose.msra.mxu0 %v1906
        %2703 = vmatprep.subr.bf16.mxu0 %v1915
        %2704 = vmatpush1.bf16.xpose.msra.mxu0 %v1914
        %2705 = vmatprep.subr.bf16.mxu0 %v1923
        %2706 = vmatpush1.bf16.xpose.msra.mxu0 %v1922
        %2707 = vmatprep.subr.bf16.mxu0 %v1931
        %2708 = vmatpush1.bf16.xpose.msra.mxu0 %v1930
        %2709 = vmatprep.subr.bf16.mxu0 %v1939
        %2710 = vmatpush1.bf16.xpose.msra.mxu0 %v1938
        %2711 = vmatprep.subr.bf16.mxu0 %v1947
        %2712 = vmatpush1.bf16.xpose.msra.mxu0 %v1946
        %2713 = vmatprep.subr.bf16.mxu0 %v1955
        %2714 = vmatpush1.bf16.xpose.msra.mxu0 %v1954
        %2715 = vmatprep.subr.bf16.mxu0 %v1963
        %2716 = vmatpush1.bf16.xpose.msra.mxu0 %v1962
        %2717 = vmatprep.subr.bf16.mxu0 %v1971
        %2718 = vmatpush1.bf16.xpose.msra.mxu0 %v1970
        %2719 = vmatprep.subr.bf16.mxu0 %v1979
        %2720 = vmatpush1.bf16.xpose.msra.mxu0 %v1978
        %2721 = vmatprep.subr.bf16.mxu0 %v1987
        %2722 = vmatpush1.bf16.xpose.msra.mxu0 %v1986
        %2723 = vmatprep.subr.bf16.mxu0 %v1995
        %2724 = vmatpush1.bf16.xpose.msra.mxu0 %v1994
        %2725 = vmatprep.subr.bf16.mxu0 %v2003
        %2726 = vmatpush1.bf16.xpose.msra.mxu0 %v2002
        %2727 = vmatprep.mubr.bf16.mxu0 %v575
        %2728 = vmatmul.mubr.bf16.gmra.mrb[0].mxu0 %v567
        %v2729 = vpop.f32.mrb[0].mxu0
        %v2730 = vadd.f32 %v556, %v2729
        %v2731 = vpop.f32.mrb[0].mxu0
        %v2732 = vadd.f32 %v2526, %v2731
        %v2733 = vpop.f32.mrb[0].mxu0
        %v2734 = vpop.f32.mrb[0].mxu0
        %2735 = vdwg.mxu0
        %2736 = vmatprep.subr.bf16.mxu0 %v1885
        %2737 = vmatpush1.bf16.xpose.msra.mxu0 %v1884
        %2738 = vmatprep.subr.bf16.mxu0 %v1893
        %2739 = vmatpush1.bf16.xpose.msra.mxu0 %v1892
        %2740 = vmatprep.subr.bf16.mxu0 %v1901
        %2741 = vmatpush1.bf16.xpose.msra.mxu0 %v1900
        %2742 = vmatprep.subr.bf16.mxu0 %v1909
        %2743 = vmatpush1.bf16.xpose.msra.mxu0 %v1908
        %2744 = vmatprep.subr.bf16.mxu0 %v1917
        %2745 = vmatpush1.bf16.xpose.msra.mxu0 %v1916
        %2746 = vmatprep.subr.bf16.mxu0 %v1925
        %2747 = vmatpush1.bf16.xpose.msra.mxu0 %v1924
        %2748 = vmatprep.subr.bf16.mxu0 %v1933
        %2749 = vmatpush1.bf16.xpose.msra.mxu0 %v1932
        %2750 = vmatprep.subr.bf16.mxu0 %v1941
        %2751 = vmatpush1.bf16.xpose.msra.mxu0 %v1940
        %2752 = vmatprep.subr.bf16.mxu0 %v1949
        %2753 = vmatpush1.bf16.xpose.msra.mxu0 %v1948
        %2754 = vmatprep.subr.bf16.mxu0 %v1957
        %2755 = vmatpush1.bf16.xpose.msra.mxu0 %v1956
        %2756 = vmatprep.subr.bf16.mxu0 %v1965
        %2757 = vmatpush1.bf16.xpose.msra.mxu0 %v1964
        %2758 = vmatprep.subr.bf16.mxu0 %v1973
        %2759 = vmatpush1.bf16.xpose.msra.mxu0 %v1972
        %2760 = vmatprep.subr.bf16.mxu0 %v1981
        %2761 = vmatpush1.bf16.xpose.msra.mxu0 %v1980
        %2762 = vmatprep.subr.bf16.mxu0 %v1989
        %2763 = vmatpush1.bf16.xpose.msra.mxu0 %v1988
        %2764 = vmatprep.subr.bf16.mxu0 %v1997
        %2765 = vmatpush1.bf16.xpose.msra.mxu0 %v1996
        %2766 = vmatprep.subr.bf16.mxu0 %v2005
        %2767 = vmatpush1.bf16.xpose.msra.mxu0 %v2004
        %2768 = vmatprep.mubr.bf16.mxu0 %v576
        %2769 = vmatmul.mubr.bf16.gmra.mrb[0].mxu0 %v574
        %v2770 = vpop.f32.mrb[0].mxu0
        %v2771 = vadd.f32 %v2730, %v2770
        %v2772 = vpop.f32.mrb[0].mxu0
        %v2773 = vadd.f32 %v2732, %v2772
        %v2774 = vpop.f32.mrb[0].mxu0
        %v2775 = vpop.f32.mrb[0].mxu0
        %2776 = vdwg.mxu0
        %2777 = vmatprep.subr.bf16.mxu0 %v1887
        %2778 = vmatpush1.bf16.xpose.msra.mxu0 %v1886
        %2779 = vmatprep.subr.bf16.mxu0 %v1895
        %2780 = vmatpush1.bf16.xpose.msra.mxu0 %v1894
        %2781 = vmatprep.subr.bf16.mxu0 %v1903
        %2782 = vmatpush1.bf16.xpose.msra.mxu0 %v1902
        %2783 = vmatprep.subr.bf16.mxu0 %v1911
        %2784 = vmatpush1.bf16.xpose.msra.mxu0 %v1910
        %2785 = vmatprep.subr.bf16.mxu0 %v1919
        %2786 = vmatpush1.bf16.xpose.msra.mxu0 %v1918
        %2787 = vmatprep.subr.bf16.mxu0 %v1927
        %2788 = vmatpush1.bf16.xpose.msra.mxu0 %v1926
        %2789 = vmatprep.subr.bf16.mxu0 %v1935
        %2790 = vmatpush1.bf16.xpose.msra.mxu0 %v1934
        %2791 = vmatprep.subr.bf16.mxu0 %v1943
        %2792 = vmatpush1.bf16.xpose.msra.mxu0 %v1942
        %2793 = vmatprep.subr.bf16.mxu0 %v1951
        %2794 = vmatpush1.bf16.xpose.msra.mxu0 %v1950
        %2795 = vmatprep.subr.bf16.mxu0 %v1959
        %2796 = vmatpush1.bf16.xpose.msra.mxu0 %v1958
        %2797 = vmatprep.subr.bf16.mxu0 %v1967
        %2798 = vmatpush1.bf16.xpose.msra.mxu0 %v1966
        %2799 = vmatprep.subr.bf16.mxu0 %v1975
        %2800 = vmatpush1.bf16.xpose.msra.mxu0 %v1974
        %2801 = vmatprep.subr.bf16.mxu0 %v1983
        %2802 = vmatpush1.bf16.xpose.msra.mxu0 %v1982
        %2803 = vmatprep.subr.bf16.mxu0 %v1991
        %2804 = vmatpush1.bf16.xpose.msra.mxu0 %v1990
        %2805 = vmatprep.subr.bf16.mxu0 %v1999
        %2806 = vmatpush1.bf16.xpose.msra.mxu0 %v1998
        %2807 = vmatprep.subr.bf16.mxu0 %v2007
        %2808 = vmatpush1.bf16.xpose.msra.mxu0 %v2006
        %2809 = vmatprep.mubr.bf16.mxu0 %v592
        %2810 = vmatmul.mubr.bf16.gmra.mrb[0].mxu0 %v584
        %v2811 = vpop.f32.mrb[0].mxu0
        %v2812 = vadd.f32 %v2771, %v2811
        %v2813 = vpop.f32.mrb[0].mxu0
        %v2814 = vadd.f32 %v2773, %v2813
        %v2815 = vpop.f32.mrb[0].mxu0
        %v2816 = vpop.f32.mrb[0].mxu0
        %2817 = vdwg.mxu0
        %2818 = vmatprep.subr.bf16.mxu0 %v1889
        %2819 = vmatpush1.bf16.xpose.msra.mxu0 %v1888
        %2820 = vmatprep.subr.bf16.mxu0 %v1897
        %2821 = vmatpush1.bf16.xpose.msra.mxu0 %v1896
        %2822 = vmatprep.subr.bf16.mxu0 %v1905
        %2823 = vmatpush1.bf16.xpose.msra.mxu0 %v1904
        %2824 = vmatprep.subr.bf16.mxu0 %v1913
        %2825 = vmatpush1.bf16.xpose.msra.mxu0 %v1912
        %2826 = vmatprep.subr.bf16.mxu0 %v1921
        %2827 = vmatpush1.bf16.xpose.msra.mxu0 %v1920
        %2828 = vmatprep.subr.bf16.mxu0 %v1929
        %2829 = vmatpush1.bf16.xpose.msra.mxu0 %v1928
        %2830 = vmatprep.subr.bf16.mxu0 %v1937
        %2831 = vmatpush1.bf16.xpose.msra.mxu0 %v1936
        %2832 = vmatprep.subr.bf16.mxu0 %v1945
        %2833 = vmatpush1.bf16.xpose.msra.mxu0 %v1944
        %2834 = vmatprep.subr.bf16.mxu0 %v1953
        %2835 = vmatpush1.bf16.xpose.msra.mxu0 %v1952
        %2836 = vmatprep.subr.bf16.mxu0 %v1961
        %2837 = vmatpush1.bf16.xpose.msra.mxu0 %v1960
        %2838 = vmatprep.subr.bf16.mxu0 %v1969
        %2839 = vmatpush1.bf16.xpose.msra.mxu0 %v1968
        %2840 = vmatprep.subr.bf16.mxu0 %v1977
        %2841 = vmatpush1.bf16.xpose.msra.mxu0 %v1976
        %2842 = vmatprep.subr.bf16.mxu0 %v1985
        %2843 = vmatpush1.bf16.xpose.msra.mxu0 %v1984
        %2844 = vmatprep.subr.bf16.mxu0 %v1993
        %2845 = vmatpush1.bf16.xpose.msra.mxu0 %v1992
        %2846 = vmatprep.subr.bf16.mxu0 %v2001
        %2847 = vmatpush1.bf16.xpose.msra.mxu0 %v2000
        %2848 = vmatprep.subr.bf16.mxu0 %v2009
        %2849 = vmatpush1.bf16.xpose.msra.mxu0 %v2008
        %2850 = vmatprep.mubr.bf16.mxu0 %v593
        %2851 = vmatmul.mubr.bf16.gmra.mrb[0].mxu0 %v591
        %v2852 = vpop.f32.mrb[0].mxu0
        %v2853 = vadd.f32 %v2812, %v2852
        %v2854 = vpop.f32.mrb[0].mxu0
        %v2855 = vadd.f32 %v2814, %v2854
        %v2856 = vpop.f32.mrb[0].mxu0
        %v2857 = vpop.f32.mrb[0].mxu0
        %2858 = vdwg.mxu0
        %2859 = vmatprep.subr.bf16.mxu0 %v2011
        %2860 = vmatpush1.bf16.xpose.msra.mxu0 %v2010
        %2861 = vmatprep.subr.bf16.mxu0 %v2019
        %2862 = vmatpush1.bf16.xpose.msra.mxu0 %v2018
        %2863 = vmatprep.subr.bf16.mxu0 %v2027
        %2864 = vmatpush1.bf16.xpose.msra.mxu0 %v2026
        %2865 = vmatprep.subr.bf16.mxu0 %v2035
        %2866 = vmatpush1.bf16.xpose.msra.mxu0 %v2034
        %2867 = vmatprep.subr.bf16.mxu0 %v2043
        %2868 = vmatpush1.bf16.xpose.msra.mxu0 %v2042
        %2869 = vmatprep.subr.bf16.mxu0 %v2051
        %2870 = vmatpush1.bf16.xpose.msra.mxu0 %v2050
        %2871 = vmatprep.subr.bf16.mxu0 %v2059
        %2872 = vmatpush1.bf16.xpose.msra.mxu0 %v2058
        %2873 = vmatprep.subr.bf16.mxu0 %v2067
        %2874 = vmatpush1.bf16.xpose.msra.mxu0 %v2066
        %2875 = vmatprep.subr.bf16.mxu0 %v2075
        %2876 = vmatpush1.bf16.xpose.msra.mxu0 %v2074
        %2877 = vmatprep.subr.bf16.mxu0 %v2083
        %2878 = vmatpush1.bf16.xpose.msra.mxu0 %v2082
        %2879 = vmatprep.subr.bf16.mxu0 %v2091
        %2880 = vmatpush1.bf16.xpose.msra.mxu0 %v2090
        %2881 = vmatprep.subr.bf16.mxu0 %v2099
        %2882 = vmatpush1.bf16.xpose.msra.mxu0 %v2098
        %2883 = vmatprep.subr.bf16.mxu0 %v2107
        %2884 = vmatpush1.bf16.xpose.msra.mxu0 %v2106
        %2885 = vmatprep.subr.bf16.mxu0 %v2115
        %2886 = vmatpush1.bf16.xpose.msra.mxu0 %v2114
        %2887 = vmatprep.subr.bf16.mxu0 %v2123
        %2888 = vmatpush1.bf16.xpose.msra.mxu0 %v2122
        %2889 = vmatprep.subr.bf16.mxu0 %v2131
        %2890 = vmatpush1.bf16.xpose.msra.mxu0 %v2130
        %2891 = vmatprep.mubr.bf16.mxu0 %v575
        %2892 = vmatmul.mubr.bf16.gmra.mrb[0].mxu0 %v567
        %v2893 = vpop.f32.mrb[0].mxu0
        %v2894 = vadd.f32 %v557, %v2893
        %v2895 = vpop.f32.mrb[0].mxu0
        %v2896 = vadd.f32 %v2527, %v2895
        %v2897 = vpop.f32.mrb[0].mxu0
        %v2898 = vpop.f32.mrb[0].mxu0
        %2899 = vdwg.mxu0
        %2900 = vmatprep.subr.bf16.mxu0 %v2013
        %2901 = vmatpush1.bf16.xpose.msra.mxu0 %v2012
        %2902 = vmatprep.subr.bf16.mxu0 %v2021
        %2903 = vmatpush1.bf16.xpose.msra.mxu0 %v2020
        %2904 = vmatprep.subr.bf16.mxu0 %v2029
        %2905 = vmatpush1.bf16.xpose.msra.mxu0 %v2028
        %2906 = vmatprep.subr.bf16.mxu0 %v2037
        %2907 = vmatpush1.bf16.xpose.msra.mxu0 %v2036
        %2908 = vmatprep.subr.bf16.mxu0 %v2045
        %2909 = vmatpush1.bf16.xpose.msra.mxu0 %v2044
        %2910 = vmatprep.subr.bf16.mxu0 %v2053
        %2911 = vmatpush1.bf16.xpose.msra.mxu0 %v2052
        %2912 = vmatprep.subr.bf16.mxu0 %v2061
        %2913 = vmatpush1.bf16.xpose.msra.mxu0 %v2060
        %2914 = vmatprep.subr.bf16.mxu0 %v2069
        %2915 = vmatpush1.bf16.xpose.msra.mxu0 %v2068
        %2916 = vmatprep.subr.bf16.mxu0 %v2077
        %2917 = vmatpush1.bf16.xpose.msra.mxu0 %v2076
        %2918 = vmatprep.subr.bf16.mxu0 %v2085
        %2919 = vmatpush1.bf16.xpose.msra.mxu0 %v2084
        %2920 = vmatprep.subr.bf16.mxu0 %v2093
        %2921 = vmatpush1.bf16.xpose.msra.mxu0 %v2092
        %2922 = vmatprep.subr.bf16.mxu0 %v2101
        %2923 = vmatpush1.bf16.xpose.msra.mxu0 %v2100
        %2924 = vmatprep.subr.bf16.mxu0 %v2109
        %2925 = vmatpush1.bf16.xpose.msra.mxu0 %v2108
        %2926 = vmatprep.subr.bf16.mxu0 %v2117
        %2927 = vmatpush1.bf16.xpose.msra.mxu0 %v2116
        %2928 = vmatprep.subr.bf16.mxu0 %v2125
        %2929 = vmatpush1.bf16.xpose.msra.mxu0 %v2124
        %2930 = vmatprep.subr.bf16.mxu0 %v2133
        %2931 = vmatpush1.bf16.xpose.msra.mxu0 %v2132
        %2932 = vmatprep.mubr.bf16.mxu0 %v576
        %2933 = vmatmul.mubr.bf16.gmra.mrb[0].mxu0 %v574
        %v2934 = vpop.f32.mrb[0].mxu0
        %v2935 = vadd.f32 %v2894, %v2934
        %v2936 = vpop.f32.mrb[0].mxu0
        %v2937 = vadd.f32 %v2896, %v2936
        %v2938 = vpop.f32.mrb[0].mxu0
        %v2939 = vpop.f32.mrb[0].mxu0
        %2940 = vdwg.mxu0
        %2941 = vmatprep.subr.bf16.mxu0 %v2015
        %2942 = vmatpush1.bf16.xpose.msra.mxu0 %v2014
        %2943 = vmatprep.subr.bf16.mxu0 %v2023
        %2944 = vmatpush1.bf16.xpose.msra.mxu0 %v2022
        %2945 = vmatprep.subr.bf16.mxu0 %v2031
        %2946 = vmatpush1.bf16.xpose.msra.mxu0 %v2030
        %2947 = vmatprep.subr.bf16.mxu0 %v2039
        %2948 = vmatpush1.bf16.xpose.msra.mxu0 %v2038
        %2949 = vmatprep.subr.bf16.mxu0 %v2047
        %2950 = vmatpush1.bf16.xpose.msra.mxu0 %v2046
        %2951 = vmatprep.subr.bf16.mxu0 %v2055
        %2952 = vmatpush1.bf16.xpose.msra.mxu0 %v2054
        %2953 = vmatprep.subr.bf16.mxu0 %v2063
        %2954 = vmatpush1.bf16.xpose.msra.mxu0 %v2062
        %2955 = vmatprep.subr.bf16.mxu0 %v2071
        %2956 = vmatpush1.bf16.xpose.msra.mxu0 %v2070
        %2957 = vmatprep.subr.bf16.mxu0 %v2079
        %2958 = vmatpush1.bf16.xpose.msra.mxu0 %v2078
        %2959 = vmatprep.subr.bf16.mxu0 %v2087
        %2960 = vmatpush1.bf16.xpose.msra.mxu0 %v2086
        %2961 = vmatprep.subr.bf16.mxu0 %v2095
        %2962 = vmatpush1.bf16.xpose.msra.mxu0 %v2094
        %2963 = vmatprep.subr.bf16.mxu0 %v2103
        %2964 = vmatpush1.bf16.xpose.msra.mxu0 %v2102
        %2965 = vmatprep.subr.bf16.mxu0 %v2111
        %2966 = vmatpush1.bf16.xpose.msra.mxu0 %v2110
        %2967 = vmatprep.subr.bf16.mxu0 %v2119
        %2968 = vmatpush1.bf16.xpose.msra.mxu0 %v2118
        %2969 = vmatprep.subr.bf16.mxu0 %v2127
        %2970 = vmatpush1.bf16.xpose.msra.mxu0 %v2126
        %2971 = vmatprep.subr.bf16.mxu0 %v2135
        %2972 = vmatpush1.bf16.xpose.msra.mxu0 %v2134
        %2973 = vmatprep.mubr.bf16.mxu0 %v592
        %2974 = vmatmul.mubr.bf16.gmra.mrb[0].mxu0 %v584
        %v2975 = vpop.f32.mrb[0].mxu0
        %v2976 = vadd.f32 %v2935, %v2975
        %v2977 = vpop.f32.mrb[0].mxu0
        %v2978 = vadd.f32 %v2937, %v2977
        %v2979 = vpop.f32.mrb[0].mxu0
        %v2980 = vpop.f32.mrb[0].mxu0
        %2981 = vdwg.mxu0
        %2982 = vmatprep.subr.bf16.mxu0 %v2017
        %2983 = vmatpush1.bf16.xpose.msra.mxu0 %v2016
        %2984 = vmatprep.subr.bf16.mxu0 %v2025
        %2985 = vmatpush1.bf16.xpose.msra.mxu0 %v2024
        %2986 = vmatprep.subr.bf16.mxu0 %v2033
        %2987 = vmatpush1.bf16.xpose.msra.mxu0 %v2032
        %2988 = vmatprep.subr.bf16.mxu0 %v2041
        %2989 = vmatpush1.bf16.xpose.msra.mxu0 %v2040
        %2990 = vmatprep.subr.bf16.mxu0 %v2049
        %2991 = vmatpush1.bf16.xpose.msra.mxu0 %v2048
        %2992 = vmatprep.subr.bf16.mxu0 %v2057
        %2993 = vmatpush1.bf16.xpose.msra.mxu0 %v2056
        %2994 = vmatprep.subr.bf16.mxu0 %v2065
        %2995 = vmatpush1.bf16.xpose.msra.mxu0 %v2064
        %2996 = vmatprep.subr.bf16.mxu0 %v2073
        %2997 = vmatpush1.bf16.xpose.msra.mxu0 %v2072
        %2998 = vmatprep.subr.bf16.mxu0 %v2081
        %2999 = vmatpush1.bf16.xpose.msra.mxu0 %v2080
        %3000 = vmatprep.subr.bf16.mxu0 %v2089
        %3001 = vmatpush1.bf16.xpose.msra.mxu0 %v2088
        %3002 = vmatprep.subr.bf16.mxu0 %v2097
        %3003 = vmatpush1.bf16.xpose.msra.mxu0 %v2096
        %3004 = vmatprep.subr.bf16.mxu0 %v2105
        %3005 = vmatpush1.bf16.xpose.msra.mxu0 %v2104
        %3006 = vmatprep.subr.bf16.mxu0 %v2113
        %3007 = vmatpush1.bf16.xpose.msra.mxu0 %v2112
        %3008 = vmatprep.subr.bf16.mxu0 %v2121
        %3009 = vmatpush1.bf16.xpose.msra.mxu0 %v2120
        %3010 = vmatprep.subr.bf16.mxu0 %v2129
        %3011 = vmatpush1.bf16.xpose.msra.mxu0 %v2128
        %3012 = vmatprep.subr.bf16.mxu0 %v2137
        %3013 = vmatpush1.bf16.xpose.msra.mxu0 %v2136
        %3014 = vmatprep.mubr.bf16.mxu0 %v593
        %3015 = vmatmul.mubr.bf16.gmra.mrb[0].mxu0 %v591
        %v3016 = vpop.f32.mrb[0].mxu0
        %v3017 = vadd.f32 %v2976, %v3016
        %v3018 = vpop.f32.mrb[0].mxu0
        %v3019 = vadd.f32 %v2978, %v3018
        %v3020 = vpop.f32.mrb[0].mxu0
        %v3021 = vpop.f32.mrb[0].mxu0
        %3022 = vdwg.mxu0
        %v3029 = vcombine.low %v2689, %v2691
        %v3030 = vcombine.low %v2853, %v2855
        %v3031 = vcombine.low %v3017, %v3019
        %3035 = vst [vmem:[%s163] sm:$0xff] %v3029
        %3036 = vst [vmem:[%s163 + $0x8] sm:$0xff] %v3030
        %3037 = vst [vmem:[%s163 + $0x10] sm:$0xff] %v3031
        %s3038 = sand.u32 %s93, 1
        %s3039 = scalar_lea.sflag [#allocation3], %s3038
        %s3040 = sand.u32 %s93, 1
        %s3041 = smul.addr %s3040, 24
        %s3042 = scalar_lea.vmem [#allocation2], %s3041
        // Predicated region
        $region33: #{embeddings_forward.1} parent=31 // pred_check
          %p3043 = pneg %p103
        $region34: #{embeddings_forward.1} parent=31 // pred_check_branch
          %3045 = sbr.rel (%p3043) target = $region36
        $region35: #{embeddings_forward.1} parent=31 // pred_region
          %s3047 = ssub.s32 384, 384
          %3048 = vsyncadd %s3039, %s3047
          %s3049 = smul.addr %s17, 6
          %s3050 = smul.addr %s3049, 64
          %s3051 = scalar_lea.hbm %s3, %s3050
          %s3053 = sshll.u32 %s3042, 4
          %s3054 = int_to_ptr.vmem [resolvable:$true] %s3053
          %3056 = dma.vmem_to_hbm [thread:$0]  %s3054, 384, %s3051, %s3039
        $region36: #{embeddings_forward.1} parent=31 // pred_fallthru
          _
      $region32: #{embeddings_forward.1} parent=5 // pred_fallthru
        _
      %p3057 = scmp.le.s32.totalorder 2, %s12
      // Predicated region
      $region37: #{embeddings_forward.1} parent=5 // pred_check
        %p3058 = pneg %p3057
      $region38: #{embeddings_forward.1} parent=5 // pred_check_branch
        %3060 = sbr.rel (%p3058) target = $region40
      $region39: #{embeddings_forward.1} parent=5 // pred_region
        %s3061 = ssub.s32 %s12, 2
        // Predicated region
        $region41: #{embeddings_forward.1} parent=39 // pred_check
          %p3062 = pneg %p109
        $region42: #{embeddings_forward.1} parent=39 // pred_check_branch
          %3064 = sbr.rel (%p3062) target = $region44
        $region43: #{embeddings_forward.1} parent=39 // pred_region
          %s3065 = sand.u32 %s94, 1
          %s3066 = scalar_lea.sflag [#allocation3], %s3065
          %s3067 = sand.u32 %s94, 1
          %s3068 = smul.addr %s3067, 24
          %s3069 = scalar_lea.vmem [#allocation2], %s3068
          %3070 = dma.done %s3066, 384
        $region44: #{embeddings_forward.1} parent=39 // pred_fallthru
          _
      $region40: #{embeddings_forward.1} parent=5 // pred_fallthru
        _
    $region6: #{embeddings_forward.1} parent=1 // loop_footer
      %s16 = sadd.s32 1, %s12
    $region7: #{embeddings_forward.1} parent=1 // loop_footer_branch
      %11 = sbr.rel target = $region3
    $region8: #{embeddings_forward.1} parent=1 // loop_exit
      _
    %3071 = vsyncpa [#allocation3], 1
    %s3072 = scalar_lea.sflag [#allocation3], 1
    %3073 = vsyncpa %s3072, 1

</llo_original>
